<compile_context>
chip_gen: v7x
topology: tpu7x:2x2x1
jax: 0.10.0
libtpu: 0.0.40
codegen_flags: <defaults>
</compile_context>

<pallas_src>
import numpy as np

import jax
import jax.numpy as jnp
from jax.experimental import pallas as pl
from jax.experimental.pallas import tpu as pltpu


# ----------------------------------------------------------------------------
# The fused Pallas kernel (one grid step == one image)
# ----------------------------------------------------------------------------
def _lenet_kernel(x_ref, t1_ref, b1_ref, pr1_ref, pc1_ref,
                  t2_ref, b2_ref, pr2_ref, pc2_ref,
                  w1_ref, fb1_ref, w2_ref, fb2_ref, w3_ref, fb3_ref,
                  o_ref, h_ref, g_ref):
    f32 = jnp.float32
    kh1 = t1_ref.shape[0]                     # conv1 kernel height (5)
    kh2 = t2_ref.shape[0]                     # conv2 kernel height (5)
    h1o = x_ref.shape[1] - kh1 + 1            # conv1 output height (28)
    h2o = pr1_ref.shape[0] - kh2 + 1          # conv2 output height (10)
    n_rows = w1_ref.shape[0]                  # pooled2 height (5)

    # ---- conv1 as kh1 Toeplitz matmuls (MXU) + bias + ReLU; layout (H, W*C) ----
    acc = jnp.dot(x_ref[0, pl.ds(0, h1o), :], t1_ref[0], preferred_element_type=f32)
    for dh in range(1, kh1):
        acc = acc + jnp.dot(x_ref[0, pl.ds(dh, h1o), :], t1_ref[dh],
                            preferred_element_type=f32)
    acc = jnp.maximum(acc + b1_ref[...], 0.0)                       # (28, 28*C1)

    # ---- 2x2 avg-pool: rows then interleaved (width, channel) columns ----
    h_ref[...] = jnp.dot(jnp.dot(pr1_ref[...], acc, preferred_element_type=f32),
                         pc1_ref[...], preferred_element_type=f32)  # (14, 14*C1)

    # ---- conv2 + bias + ReLU ----
    acc2 = jnp.dot(h_ref[pl.ds(0, h2o), :], t2_ref[0], preferred_element_type=f32)
    for dh in range(1, kh2):
        acc2 = acc2 + jnp.dot(h_ref[pl.ds(dh, h2o), :], t2_ref[dh],
                              preferred_element_type=f32)
    acc2 = jnp.maximum(acc2 + b2_ref[...], 0.0)                     # (10, 10*C2)

    # ---- 2x2 avg-pool ----
    g_ref[...] = jnp.dot(jnp.dot(pr2_ref[...], acc2, preferred_element_type=f32),
                         pc2_ref[...], preferred_element_type=f32)  # (5, 5*C2)

    # ---- flatten folded into the pre-permuted fc1 weight; fc1 + ReLU ----
    f1 = jnp.dot(g_ref[pl.ds(0, 1), :], w1_ref[0], preferred_element_type=f32)
    for i in range(1, n_rows):
        f1 = f1 + jnp.dot(g_ref[pl.ds(i, 1), :], w1_ref[i], preferred_element_type=f32)
    f1 = jnp.maximum(f1 + fb1_ref[...], 0.0)                        # (1, 120)

    # ---- fc2 + ReLU, fc ----
    f2 = jnp.maximum(jnp.dot(f1, w2_ref[...], preferred_element_type=f32)
                     + fb2_ref[...], 0.0)                           # (1, 84)
    logits = jnp.dot(f2, w3_ref[...], preferred_element_type=f32) + fb3_ref[...]
    o_ref[0] = logits.astype(o_ref.dtype)                           # (1, num_classes)


# ----------------------------------------------------------------------------
# One-time weight packing (outside the forward; pure layout work)
# ----------------------------------------------------------------------------
def prepack_params(p, in_hw=32):
    """Pack the PyTorch-layout parameters into the matrices the kernel expects."""
    c1w = p["conv1_w"].astype(jnp.float32)          # (C1, 1, 5, 5)
    c2w = p["conv2_w"].astype(jnp.float32)          # (C2, C1, 5, 5)
    C1, C2, K = c1w.shape[0], c2w.shape[0], c1w.shape[-1]

    W0 = in_hw
    W1o = W0 - K + 1            # 28
    W1p = W1o // 2              # 14
    W2o = W1p - K + 1           # 10
    W2p = W2o // 2              # 5

    hp = jax.lax.Precision.HIGHEST

    def toeplitz(w, w_in):
        # T[dh, w_in*Cin+ci, j*Cout+co] = w[co, ci, dh, w_in - j] (0 <= w_in-j < KW)
        Cout, Cin, KH, KW = w.shape
        wo = w_in - KW + 1
        S = np.zeros((KW, w_in, wo), np.float32)
        for k in range(KW):
            S[k, np.arange(wo) + k, np.arange(wo)] = 1.0
        T = jnp.einsum("kpq,oihk->hpiqo", jnp.asarray(S), w, precision=hp)
        return T.reshape(KH, w_in * Cin, wo * Cout)

    def pool_mats(n, C):
        # Row matrix (n//2, n) and interleaved-column matrix (n*C, (n//2)*C), 0.5 entries.
        m = n // 2
        Pr = np.zeros((m, n), np.float32)
        Pr[np.arange(m), 2 * np.arange(m)] = 0.5
        Pr[np.arange(m), 2 * np.arange(m) + 1] = 0.5
        Pc = np.zeros((n * C, m * C), np.float32)
        jp = np.repeat(np.arange(m), C)
        cc = np.tile(np.arange(C), m)
        for d in range(2):
            Pc[(2 * jp + d) * C + cc, jp * C + cc] = 0.5
        return jnp.asarray(Pr), jnp.asarray(Pc)

    pr1, pc1 = pool_mats(W1o, C1)
    pr2, pc2 = pool_mats(W2o, C2)

    # fc1 weight: fold torch's NCHW flatten (c*25 + i*5 + j) into a column permutation
    # matching our (i, j*C2 + c) activation layout; split by row i -> (5, 5*C2, 120).
    n_hidden = p["fc1_w"].shape[0]
    assert p["fc1_w"].shape[1] == C2 * W2p * W2p, (
        "cfg must be consistent (use cfg=[6,6], i.e. args.arch='le6_6')")
    w1 = p["fc1_w"].astype(jnp.float32).reshape(n_hidden, C2, W2p, W2p)   # (n,c,i,j)
    w1p = jnp.transpose(w1, (2, 3, 1, 0)).reshape(W2p, W2p * C2, n_hidden)

    return dict(
        t1=toeplitz(c1w, W0),                                             # (5, 32, 28*C1)
        b1=jnp.tile(p["conv1_b"].astype(jnp.float32), W1o).reshape(1, -1),
        pr1=pr1, pc1=pc1,
        t2=toeplitz(c2w, W1p),                                            # (5, 14*C1, 10*C2)
        b2=jnp.tile(p["conv2_b"].astype(jnp.float32), W2o).reshape(1, -1),
        pr2=pr2, pc2=pc2,
        w1=w1p, fb1=p["fc1_b"].astype(jnp.float32).reshape(1, -1),
        w2=p["fc2_w"].astype(jnp.float32).T,
        fb2=p["fc2_b"].astype(jnp.float32).reshape(1, -1),
        w3=p["fc_w"].astype(jnp.float32).T,
        fb3=p["fc_b"].astype(jnp.float32).reshape(1, -1),
    )


# ----------------------------------------------------------------------------
# Fused forward: one pallas_call, grid over batch (parallel for v7x 2 TCs)
# ----------------------------------------------------------------------------
def lenet_forward(x_nchw, pk):
    B, Cin, H, W = x_nchw.shape
    assert Cin == 1, "LeNet first conv expects a single input channel"
    num_classes = pk["fb3"].shape[-1]
    x = x_nchw.astype(jnp.float32).reshape(B, H, W)          # (B, H, W*Cin), Cin=1

    weights = (pk["t1"], pk["b1"], pk["pr1"], pk["pc1"],
               pk["t2"], pk["b2"], pk["pr2"], pk["pc2"],
               pk["w1"], pk["fb1"], pk["w2"], pk["fb2"], pk["w3"], pk["fb3"])

    def const_spec(a):
        return pl.BlockSpec(a.shape, lambda b: (0,) * a.ndim)  # resident across the grid

    in_specs = [pl.BlockSpec((1, H, W), lambda b: (b, 0, 0))]
    in_specs += [const_spec(a) for a in weights]

    h_shape = (pk["pr1"].shape[0], pk["pc1"].shape[1])        # (14, 14*C1)
    g_shape = (pk["w1"].shape[0], pk["w1"].shape[1])          # (5, 5*C2)

    out = pl.pallas_call(
        _lenet_kernel,
        out_shape=jax.ShapeDtypeStruct((B, 1, num_classes), jnp.float32),
        grid=(B,),
        in_specs=in_specs,
        out_specs=pl.BlockSpec((1, 1, num_classes), lambda b: (b, 0, 0)),
        scratch_shapes=[pltpu.VMEM(h_shape, jnp.float32),
                        pltpu.VMEM(g_shape, jnp.float32)],
        compiler_params=pltpu.CompilerParams(dimension_semantics=("parallel",)),
    )(x, *weights)
    return out.reshape(B, num_classes)


# ----------------------------------------------------------------------------
# Pure-JAX reference (mirrors the PyTorch module, NCHW, highest precision)
# ----------------------------------------------------------------------------
def lenet_forward_ref(x_nchw, p):
    hp = jax.lax.Precision.HIGHEST
    dn = ("NCHW", "OIHW", "NCHW")

    def conv_relu(x, w, b):
        y = jax.lax.conv_general_dilated(x, w, (1, 1), "VALID",
                                         dimension_numbers=dn, precision=hp)
        return jnp.maximum(y + b[None, :, None, None], 0.0)

    def pool(x):
        B, C, H, W = x.shape
        return x.reshape(B, C, H // 2, 2, W // 2, 2).mean(axis=(3, 5))

    h = pool(conv_relu(x_nchw, p["conv1_w"], p["conv1_b"]))
    h = pool(conv_relu(h, p["conv2_w"], p["conv2_b"]))
    feat = h.reshape(h.shape[0], -1)                          # torch Flatten (NCHW order)
    feat = jnp.maximum(jnp.dot(feat, p["fc1_w"].T, precision=hp) + p["fc1_b"], 0.0)
    feat = jnp.maximum(jnp.dot(feat, p["fc2_w"].T, precision=hp) + p["fc2_b"], 0.0)
    return jnp.dot(feat, p["fc_w"].T, precision=hp) + p["fc_b"]


def init_params(key, cfg=(6, 6), num_classes=100):
    ks = jax.random.split(key, 10)

    def dense(kw, kb, shape_w):
        fan_in = shape_w[-1] if len(shape_w) == 2 else shape_w[1] * shape_w[2] * shape_w[3]
        w = jax.random.normal(kw, shape_w, jnp.float32) / jnp.sqrt(float(fan_in))
        b = jax.random.normal(kb, (shape_w[0],), jnp.float32) * 0.01
        return w, b

    p = {}
    p["conv1_w"], p["conv1_b"] = dense(ks[0], ks[1], (cfg[0], 1, 5, 5))
    p["conv2_w"], p["conv2_b"] = dense(ks[2], ks[3], (cfg[1], cfg[0], 5, 5))
    p["fc1_w"], p["fc1_b"] = dense(ks[4], ks[5], (120, cfg[0] * 5 * 5))
    p["fc2_w"], p["fc2_b"] = dense(ks[6], ks[7], (84, 120))
    p["fc_w"], p["fc_b"] = dense(ks[8], ks[9], (num_classes, 84))
    return p


if __name__ == "__main__":
    key = jax.random.PRNGKey(0)
    k_x, k_p = jax.random.split(key)

    B, num_classes = 2, 100
    x = jax.random.normal(k_x, (B, 1, 32, 32), jnp.float32)   # NCHW, classic LeNet input
    params = init_params(k_p, cfg=(6, 6), num_classes=num_classes)

    packed = prepack_params(params)                           # weight packing: once
    fwd = jax.jit(lenet_forward)
    out = jax.block_until_ready(fwd(x, packed))
    assert out.shape == (B, num_classes), out.shape

    ref = lenet_forward_ref(x, params)
    max_err = float(jnp.max(jnp.abs(out - ref)))
    # Tolerance accommodates MXU default-precision (bf16-pass) matmuls vs the
    # highest-precision reference; real layout/packing bugs produce O(1) errors.
    assert jnp.allclose(out, ref, atol=1e-2, rtol=1e-2), max_err

    print("KERNEL_OK")
</pallas_src>

<mosaic_0001>
module attributes {stable_mosaic.version = 11 : i64} {
  func.func @_lenet_kernel(%arg0: i32, %arg1: memref<1x32x32xf32, #tpu.memory_space<vmem>>, %arg2: memref<5x32x168xf32, #tpu.memory_space<vmem>>, %arg3: memref<1x168xf32, #tpu.memory_space<vmem>>, %arg4: memref<14x28xf32, #tpu.memory_space<vmem>>, %arg5: memref<168x84xf32, #tpu.memory_space<vmem>>, %arg6: memref<5x84x60xf32, #tpu.memory_space<vmem>>, %arg7: memref<1x60xf32, #tpu.memory_space<vmem>>, %arg8: memref<5x10xf32, #tpu.memory_space<vmem>>, %arg9: memref<60x30xf32, #tpu.memory_space<vmem>>, %arg10: memref<5x30x120xf32, #tpu.memory_space<vmem>>, %arg11: memref<1x120xf32, #tpu.memory_space<vmem>>, %arg12: memref<120x84xf32, #tpu.memory_space<vmem>>, %arg13: memref<1x84xf32, #tpu.memory_space<vmem>>, %arg14: memref<84x100xf32, #tpu.memory_space<vmem>>, %arg15: memref<1x100xf32, #tpu.memory_space<vmem>>, %arg16: memref<1x1x100xf32, #tpu.memory_space<vmem>>, %arg17: memref<14x84xf32, #tpu.memory_space<vmem>>, %arg18: memref<5x30xf32, #tpu.memory_space<vmem>>) attributes {dimension_semantics = [#tpu.dimension_semantics<parallel>], iteration_bounds = array<i64: 2>, scalar_prefetch = 0 : i64, scratch_operands = 2 : i64, tpu.core_type = #tpu.core_type<tc>, window_params = [{transform_indices = @transform_0, window_bounds = array<i64: 1, 32, 32>}, {pipeline_mode = #tpu.pipeline_mode<synchronous>, transform_indices = @transform_1, window_bounds = array<i64: 5, 32, 168>}, {pipeline_mode = #tpu.pipeline_mode<synchronous>, transform_indices = @transform_2, window_bounds = array<i64: 1, 168>}, {pipeline_mode = #tpu.pipeline_mode<synchronous>, transform_indices = @transform_3, window_bounds = array<i64: 14, 28>}, {pipeline_mode = #tpu.pipeline_mode<synchronous>, transform_indices = @transform_4, window_bounds = array<i64: 168, 84>}, {pipeline_mode = #tpu.pipeline_mode<synchronous>, transform_indices = @transform_5, window_bounds = array<i64: 5, 84, 60>}, {pipeline_mode = #tpu.pipeline_mode<synchronous>, transform_indices = @transform_6, window_bounds = array<i64: 1, 60>}, {pipeline_mode = #tpu.pipeline_mode<synchronous>, transform_indices = @transform_7, window_bounds = array<i64: 5, 10>}, {pipeline_mode = #tpu.pipeline_mode<synchronous>, transform_indices = @transform_8, window_bounds = array<i64: 60, 30>}, {pipeline_mode = #tpu.pipeline_mode<synchronous>, transform_indices = @transform_9, window_bounds = array<i64: 5, 30, 120>}, {pipeline_mode = #tpu.pipeline_mode<synchronous>, transform_indices = @transform_10, window_bounds = array<i64: 1, 120>}, {pipeline_mode = #tpu.pipeline_mode<synchronous>, transform_indices = @transform_11, window_bounds = array<i64: 120, 84>}, {pipeline_mode = #tpu.pipeline_mode<synchronous>, transform_indices = @transform_12, window_bounds = array<i64: 1, 84>}, {pipeline_mode = #tpu.pipeline_mode<synchronous>, transform_indices = @transform_13, window_bounds = array<i64: 84, 100>}, {pipeline_mode = #tpu.pipeline_mode<synchronous>, transform_indices = @transform_14, window_bounds = array<i64: 1, 100>}, {transform_indices = @transform_15, window_bounds = array<i64: 1, 1, 100>}]} {
    %c0 = arith.constant 0 : index
    %c0_0 = arith.constant 0 : index
    %c0_1 = arith.constant 0 : index
    %0 = vector.load %arg1[%c0, %c0_0, %c0_1] : memref<1x32x32xf32, #tpu.memory_space<vmem>>, vector<1x28x32xf32>
    %1 = vector.shape_cast %0 : vector<1x28x32xf32> to vector<28x32xf32>
    %c0_2 = arith.constant 0 : index
    %c0_3 = arith.constant 0 : index
    %c0_4 = arith.constant 0 : index
    %2 = vector.load %arg2[%c0_2, %c0_3, %c0_4] : memref<5x32x168xf32, #tpu.memory_space<vmem>>, vector<1x32x168xf32>
    %3 = vector.shape_cast %2 : vector<1x32x168xf32> to vector<32x168xf32>
    %cst = arith.constant dense<0.000000e+00> : vector<28x168xf32>
    %4 = tpu.matmul %1, %3, %cst {dimension_numbers = #tpu.dot_dimension_numbers<[1], [0], [0], [1], [0, 0, 1, 1], [], []>} : vector<28x32xf32>, vector<32x168xf32>, vector<28x168xf32> -> vector<28x168xf32>
    %c0_5 = arith.constant 0 : index
    %c1 = arith.constant 1 : index
    %c0_6 = arith.constant 0 : index
    %5 = vector.load %arg1[%c0_5, %c1, %c0_6] : memref<1x32x32xf32, #tpu.memory_space<vmem>>, vector<1x28x32xf32>
    %6 = vector.shape_cast %5 : vector<1x28x32xf32> to vector<28x32xf32>
    %c1_7 = arith.constant 1 : index
    %c0_8 = arith.constant 0 : index
    %c0_9 = arith.constant 0 : index
    %7 = vector.load %arg2[%c1_7, %c0_8, %c0_9] : memref<5x32x168xf32, #tpu.memory_space<vmem>>, vector<1x32x168xf32>
    %8 = vector.shape_cast %7 : vector<1x32x168xf32> to vector<32x168xf32>
    %cst_10 = arith.constant dense<0.000000e+00> : vector<28x168xf32>
    %9 = tpu.matmul %6, %8, %cst_10 {dimension_numbers = #tpu.dot_dimension_numbers<[1], [0], [0], [1], [0, 0, 1, 1], [], []>} : vector<28x32xf32>, vector<32x168xf32>, vector<28x168xf32> -> vector<28x168xf32>
    %10 = arith.addf %4, %9 : vector<28x168xf32>
    %c0_11 = arith.constant 0 : index
    %c2 = arith.constant 2 : index
    %c0_12 = arith.constant 0 : index
    %11 = vector.load %arg1[%c0_11, %c2, %c0_12] : memref<1x32x32xf32, #tpu.memory_space<vmem>>, vector<1x28x32xf32>
    %12 = vector.shape_cast %11 : vector<1x28x32xf32> to vector<28x32xf32>
    %c2_13 = arith.constant 2 : index
    %c0_14 = arith.constant 0 : index
    %c0_15 = arith.constant 0 : index
    %13 = vector.load %arg2[%c2_13, %c0_14, %c0_15] : memref<5x32x168xf32, #tpu.memory_space<vmem>>, vector<1x32x168xf32>
    %14 = vector.shape_cast %13 : vector<1x32x168xf32> to vector<32x168xf32>
    %cst_16 = arith.constant dense<0.000000e+00> : vector<28x168xf32>
    %15 = tpu.matmul %12, %14, %cst_16 {dimension_numbers = #tpu.dot_dimension_numbers<[1], [0], [0], [1], [0, 0, 1, 1], [], []>} : vector<28x32xf32>, vector<32x168xf32>, vector<28x168xf32> -> vector<28x168xf32>
    %16 = arith.addf %10, %15 : vector<28x168xf32>
    %c0_17 = arith.constant 0 : index
    %c3 = arith.constant 3 : index
    %c0_18 = arith.constant 0 : index
    %17 = vector.load %arg1[%c0_17, %c3, %c0_18] : memref<1x32x32xf32, #tpu.memory_space<vmem>>, vector<1x28x32xf32>
    %18 = vector.shape_cast %17 : vector<1x28x32xf32> to vector<28x32xf32>
    %c3_19 = arith.constant 3 : index
    %c0_20 = arith.constant 0 : index
    %c0_21 = arith.constant 0 : index
    %19 = vector.load %arg2[%c3_19, %c0_20, %c0_21] : memref<5x32x168xf32, #tpu.memory_space<vmem>>, vector<1x32x168xf32>
    %20 = vector.shape_cast %19 : vector<1x32x168xf32> to vector<32x168xf32>
    %cst_22 = arith.constant dense<0.000000e+00> : vector<28x168xf32>
    %21 = tpu.matmul %18, %20, %cst_22 {dimension_numbers = #tpu.dot_dimension_numbers<[1], [0], [0], [1], [0, 0, 1, 1], [], []>} : vector<28x32xf32>, vector<32x168xf32>, vector<28x168xf32> -> vector<28x168xf32>
    %22 = arith.addf %16, %21 : vector<28x168xf32>
    %c0_23 = arith.constant 0 : index
    %c4 = arith.constant 4 : index
    %c0_24 = arith.constant 0 : index
    %23 = vector.load %arg1[%c0_23, %c4, %c0_24] : memref<1x32x32xf32, #tpu.memory_space<vmem>>, vector<1x28x32xf32>
    %24 = vector.shape_cast %23 : vector<1x28x32xf32> to vector<28x32xf32>
    %c4_25 = arith.constant 4 : index
    %c0_26 = arith.constant 0 : index
    %c0_27 = arith.constant 0 : index
    %25 = vector.load %arg2[%c4_25, %c0_26, %c0_27] : memref<5x32x168xf32, #tpu.memory_space<vmem>>, vector<1x32x168xf32>
    %26 = vector.shape_cast %25 : vector<1x32x168xf32> to vector<32x168xf32>
    %cst_28 = arith.constant dense<0.000000e+00> : vector<28x168xf32>
    %27 = tpu.matmul %24, %26, %cst_28 {dimension_numbers = #tpu.dot_dimension_numbers<[1], [0], [0], [1], [0, 0, 1, 1], [], []>} : vector<28x32xf32>, vector<32x168xf32>, vector<28x168xf32> -> vector<28x168xf32>
    %28 = arith.addf %22, %27 : vector<28x168xf32>
    %c0_29 = arith.constant 0 : index
    %c0_30 = arith.constant 0 : index
    %29 = vector.load %arg3[%c0_29, %c0_30] : memref<1x168xf32, #tpu.memory_space<vmem>>, vector<1x168xf32>
    %30 = vector.broadcast %29 : vector<1x168xf32> to vector<28x168xf32>
    %31 = arith.addf %28, %30 : vector<28x168xf32>
    %cst_31 = arith.constant 0.000000e+00 : f32
    %32 = vector.broadcast %cst_31 : f32 to vector<28x168xf32>
    %33 = arith.maximumf %31, %32 : vector<28x168xf32>
    %c0_32 = arith.constant 0 : index
    %c0_33 = arith.constant 0 : index
    %34 = vector.load %arg4[%c0_32, %c0_33] : memref<14x28xf32, #tpu.memory_space<vmem>>, vector<14x28xf32>
    %cst_34 = arith.constant dense<0.000000e+00> : vector<14x168xf32>
    %35 = tpu.matmul %34, %33, %cst_34 {dimension_numbers = #tpu.dot_dimension_numbers<[1], [0], [0], [1], [0, 0, 1, 1], [], []>} : vector<14x28xf32>, vector<28x168xf32>, vector<14x168xf32> -> vector<14x168xf32>
    %c0_35 = arith.constant 0 : index
    %c0_36 = arith.constant 0 : index
    %36 = vector.load %arg5[%c0_35, %c0_36] : memref<168x84xf32, #tpu.memory_space<vmem>>, vector<168x84xf32>
    %cst_37 = arith.constant dense<0.000000e+00> : vector<14x84xf32>
    %37 = tpu.matmul %35, %36, %cst_37 {dimension_numbers = #tpu.dot_dimension_numbers<[1], [0], [0], [1], [0, 0, 1, 1], [], []>} : vector<14x168xf32>, vector<168x84xf32>, vector<14x84xf32> -> vector<14x84xf32>
    %c0_38 = arith.constant 0 : index
    %c0_39 = arith.constant 0 : index
    %38 = vector.load %arg17[%c0_38, %c0_39] : memref<14x84xf32, #tpu.memory_space<vmem>>, vector<14x84xf32>
    tpu.vector_store %arg17[%c0_38, %c0_39], %37 {strides = array<i32>} : memref<14x84xf32, #tpu.memory_space<vmem>>, vector<14x84xf32>,
    %c0_40 = arith.constant 0 : index
    %c0_41 = arith.constant 0 : index
    %39 = vector.load %arg17[%c0_40, %c0_41] : memref<14x84xf32, #tpu.memory_space<vmem>>, vector<10x84xf32>
    %c0_42 = arith.constant 0 : index
    %c0_43 = arith.constant 0 : index
    %c0_44 = arith.constant 0 : index
    %40 = vector.load %arg6[%c0_42, %c0_43, %c0_44] : memref<5x84x60xf32, #tpu.memory_space<vmem>>, vector<1x84x60xf32>
    %41 = vector.shape_cast %40 : vector<1x84x60xf32> to vector<84x60xf32>
    %cst_45 = arith.constant dense<0.000000e+00> : vector<10x60xf32>
    %42 = tpu.matmul %39, %41, %cst_45 {dimension_numbers = #tpu.dot_dimension_numbers<[1], [0], [0], [1], [0, 0, 1, 1], [], []>} : vector<10x84xf32>, vector<84x60xf32>, vector<10x60xf32> -> vector<10x60xf32>
    %c1_46 = arith.constant 1 : index
    %c0_47 = arith.constant 0 : index
    %43 = vector.load %arg17[%c1_46, %c0_47] : memref<14x84xf32, #tpu.memory_space<vmem>>, vector<10x84xf32>
    %c1_48 = arith.constant 1 : index
    %c0_49 = arith.constant 0 : index
    %c0_50 = arith.constant 0 : index
    %44 = vector.load %arg6[%c1_48, %c0_49, %c0_50] : memref<5x84x60xf32, #tpu.memory_space<vmem>>, vector<1x84x60xf32>
    %45 = vector.shape_cast %44 : vector<1x84x60xf32> to vector<84x60xf32>
    %cst_51 = arith.constant dense<0.000000e+00> : vector<10x60xf32>
    %46 = tpu.matmul %43, %45, %cst_51 {dimension_numbers = #tpu.dot_dimension_numbers<[1], [0], [0], [1], [0, 0, 1, 1], [], []>} : vector<10x84xf32>, vector<84x60xf32>, vector<10x60xf32> -> vector<10x60xf32>
    %47 = arith.addf %42, %46 : vector<10x60xf32>
    %c2_52 = arith.constant 2 : index
    %c0_53 = arith.constant 0 : index
    %48 = vector.load %arg17[%c2_52, %c0_53] : memref<14x84xf32, #tpu.memory_space<vmem>>, vector<10x84xf32>
    %c2_54 = arith.constant 2 : index
    %c0_55 = arith.constant 0 : index
    %c0_56 = arith.constant 0 : index
    %49 = vector.load %arg6[%c2_54, %c0_55, %c0_56] : memref<5x84x60xf32, #tpu.memory_space<vmem>>, vector<1x84x60xf32>
    %50 = vector.shape_cast %49 : vector<1x84x60xf32> to vector<84x60xf32>
    %cst_57 = arith.constant dense<0.000000e+00> : vector<10x60xf32>
    %51 = tpu.matmul %48, %50, %cst_57 {dimension_numbers = #tpu.dot_dimension_numbers<[1], [0], [0], [1], [0, 0, 1, 1], [], []>} : vector<10x84xf32>, vector<84x60xf32>, vector<10x60xf32> -> vector<10x60xf32>
    %52 = arith.addf %47, %51 : vector<10x60xf32>
    %c3_58 = arith.constant 3 : index
    %c0_59 = arith.constant 0 : index
    %53 = vector.load %arg17[%c3_58, %c0_59] : memref<14x84xf32, #tpu.memory_space<vmem>>, vector<10x84xf32>
    %c3_60 = arith.constant 3 : index
    %c0_61 = arith.constant 0 : index
    %c0_62 = arith.constant 0 : index
    %54 = vector.load %arg6[%c3_60, %c0_61, %c0_62] : memref<5x84x60xf32, #tpu.memory_space<vmem>>, vector<1x84x60xf32>
    %55 = vector.shape_cast %54 : vector<1x84x60xf32> to vector<84x60xf32>
    %cst_63 = arith.constant dense<0.000000e+00> : vector<10x60xf32>
    %56 = tpu.matmul %53, %55, %cst_63 {dimension_numbers = #tpu.dot_dimension_numbers<[1], [0], [0], [1], [0, 0, 1, 1], [], []>} : vector<10x84xf32>, vector<84x60xf32>, vector<10x60xf32> -> vector<10x60xf32>
    %57 = arith.addf %52, %56 : vector<10x60xf32>
    %c4_64 = arith.constant 4 : index
    %c0_65 = arith.constant 0 : index
    %58 = vector.load %arg17[%c4_64, %c0_65] : memref<14x84xf32, #tpu.memory_space<vmem>>, vector<10x84xf32>
    %c4_66 = arith.constant 4 : index
    %c0_67 = arith.constant 0 : index
    %c0_68 = arith.constant 0 : index
    %59 = vector.load %arg6[%c4_66, %c0_67, %c0_68] : memref<5x84x60xf32, #tpu.memory_space<vmem>>, vector<1x84x60xf32>
    %60 = vector.shape_cast %59 : vector<1x84x60xf32> to vector<84x60xf32>
    %cst_69 = arith.constant dense<0.000000e+00> : vector<10x60xf32>
    %61 = tpu.matmul %58, %60, %cst_69 {dimension_numbers = #tpu.dot_dimension_numbers<[1], [0], [0], [1], [0, 0, 1, 1], [], []>} : vector<10x84xf32>, vector<84x60xf32>, vector<10x60xf32> -> vector<10x60xf32>
    %62 = arith.addf %57, %61 : vector<10x60xf32>
    %c0_70 = arith.constant 0 : index
    %c0_71 = arith.constant 0 : index
    %63 = vector.load %arg7[%c0_70, %c0_71] : memref<1x60xf32, #tpu.memory_space<vmem>>, vector<1x60xf32>
    %64 = vector.broadcast %63 : vector<1x60xf32> to vector<10x60xf32>
    %65 = arith.addf %62, %64 : vector<10x60xf32>
    %cst_72 = arith.constant 0.000000e+00 : f32
    %66 = vector.broadcast %cst_72 : f32 to vector<10x60xf32>
    %67 = arith.maximumf %65, %66 : vector<10x60xf32>
    %c0_73 = arith.constant 0 : index
    %c0_74 = arith.constant 0 : index
    %68 = vector.load %arg8[%c0_73, %c0_74] : memref<5x10xf32, #tpu.memory_space<vmem>>, vector<5x10xf32>
    %cst_75 = arith.constant dense<0.000000e+00> : vector<5x60xf32>
    %69 = tpu.matmul %68, %67, %cst_75 {dimension_numbers = #tpu.dot_dimension_numbers<[1], [0], [0], [1], [0, 0, 1, 1], [], []>} : vector<5x10xf32>, vector<10x60xf32>, vector<5x60xf32> -> vector<5x60xf32>
    %c0_76 = arith.constant 0 : index
    %c0_77 = arith.constant 0 : index
    %70 = vector.load %arg9[%c0_76, %c0_77] : memref<60x30xf32, #tpu.memory_space<vmem>>, vector<60x30xf32>
    %cst_78 = arith.constant dense<0.000000e+00> : vector<5x30xf32>
    %71 = tpu.matmul %69, %70, %cst_78 {dimension_numbers = #tpu.dot_dimension_numbers<[1], [0], [0], [1], [0, 0, 1, 1], [], []>} : vector<5x60xf32>, vector<60x30xf32>, vector<5x30xf32> -> vector<5x30xf32>
    %c0_79 = arith.constant 0 : index
    %c0_80 = arith.constant 0 : index
    %72 = vector.load %arg18[%c0_79, %c0_80] : memref<5x30xf32, #tpu.memory_space<vmem>>, vector<5x30xf32>
    tpu.vector_store %arg18[%c0_79, %c0_80], %71 {strides = array<i32>} : memref<5x30xf32, #tpu.memory_space<vmem>>, vector<5x30xf32>,
    %c0_81 = arith.constant 0 : index
    %c0_82 = arith.constant 0 : index
    %73 = vector.load %arg18[%c0_81, %c0_82] : memref<5x30xf32, #tpu.memory_space<vmem>>, vector<1x30xf32>
    %c0_83 = arith.constant 0 : index
    %c0_84 = arith.constant 0 : index
    %c0_85 = arith.constant 0 : index
    %74 = vector.load %arg10[%c0_83, %c0_84, %c0_85] : memref<5x30x120xf32, #tpu.memory_space<vmem>>, vector<1x30x120xf32>
    %75 = vector.shape_cast %74 : vector<1x30x120xf32> to vector<30x120xf32>
    %cst_86 = arith.constant dense<0.000000e+00> : vector<1x120xf32>
    %76 = tpu.matmul %73, %75, %cst_86 {dimension_numbers = #tpu.dot_dimension_numbers<[1], [0], [0], [1], [0, 0, 1, 1], [], []>} : vector<1x30xf32>, vector<30x120xf32>, vector<1x120xf32> -> vector<1x120xf32>
    %c1_87 = arith.constant 1 : index
    %c0_88 = arith.constant 0 : index
    %77 = vector.load %arg18[%c1_87, %c0_88] : memref<5x30xf32, #tpu.memory_space<vmem>>, vector<1x30xf32>
    %c1_89 = arith.constant 1 : index
    %c0_90 = arith.constant 0 : index
    %c0_91 = arith.constant 0 : index
    %78 = vector.load %arg10[%c1_89, %c0_90, %c0_91] : memref<5x30x120xf32, #tpu.memory_space<vmem>>, vector<1x30x120xf32>
    %79 = vector.shape_cast %78 : vector<1x30x120xf32> to vector<30x120xf32>
    %cst_92 = arith.constant dense<0.000000e+00> : vector<1x120xf32>
    %80 = tpu.matmul %77, %79, %cst_92 {dimension_numbers = #tpu.dot_dimension_numbers<[1], [0], [0], [1], [0, 0, 1, 1], [], []>} : vector<1x30xf32>, vector<30x120xf32>, vector<1x120xf32> -> vector<1x120xf32>
    %81 = arith.addf %76, %80 : vector<1x120xf32>
    %c2_93 = arith.constant 2 : index
    %c0_94 = arith.constant 0 : index
    %82 = vector.load %arg18[%c2_93, %c0_94] : memref<5x30xf32, #tpu.memory_space<vmem>>, vector<1x30xf32>
    %c2_95 = arith.constant 2 : index
    %c0_96 = arith.constant 0 : index
    %c0_97 = arith.constant 0 : index
    %83 = vector.load %arg10[%c2_95, %c0_96, %c0_97] : memref<5x30x120xf32, #tpu.memory_space<vmem>>, vector<1x30x120xf32>
    %84 = vector.shape_cast %83 : vector<1x30x120xf32> to vector<30x120xf32>
    %cst_98 = arith.constant dense<0.000000e+00> : vector<1x120xf32>
    %85 = tpu.matmul %82, %84, %cst_98 {dimension_numbers = #tpu.dot_dimension_numbers<[1], [0], [0], [1], [0, 0, 1, 1], [], []>} : vector<1x30xf32>, vector<30x120xf32>, vector<1x120xf32> -> vector<1x120xf32>
    %86 = arith.addf %81, %85 : vector<1x120xf32>
    %c3_99 = arith.constant 3 : index
    %c0_100 = arith.constant 0 : index
    %87 = vector.load %arg18[%c3_99, %c0_100] : memref<5x30xf32, #tpu.memory_space<vmem>>, vector<1x30xf32>
    %c3_101 = arith.constant 3 : index
    %c0_102 = arith.constant 0 : index
    %c0_103 = arith.constant 0 : index
    %88 = vector.load %arg10[%c3_101, %c0_102, %c0_103] : memref<5x30x120xf32, #tpu.memory_space<vmem>>, vector<1x30x120xf32>
    %89 = vector.shape_cast %88 : vector<1x30x120xf32> to vector<30x120xf32>
    %cst_104 = arith.constant dense<0.000000e+00> : vector<1x120xf32>
    %90 = tpu.matmul %87, %89, %cst_104 {dimension_numbers = #tpu.dot_dimension_numbers<[1], [0], [0], [1], [0, 0, 1, 1], [], []>} : vector<1x30xf32>, vector<30x120xf32>, vector<1x120xf32> -> vector<1x120xf32>
    %91 = arith.addf %86, %90 : vector<1x120xf32>
    %c4_105 = arith.constant 4 : index
    %c0_106 = arith.constant 0 : index
    %92 = vector.load %arg18[%c4_105, %c0_106] : memref<5x30xf32, #tpu.memory_space<vmem>>, vector<1x30xf32>
    %c4_107 = arith.constant 4 : index
    %c0_108 = arith.constant 0 : index
    %c0_109 = arith.constant 0 : index
    %93 = vector.load %arg10[%c4_107, %c0_108, %c0_109] : memref<5x30x120xf32, #tpu.memory_space<vmem>>, vector<1x30x120xf32>
    %94 = vector.shape_cast %93 : vector<1x30x120xf32> to vector<30x120xf32>
    %cst_110 = arith.constant dense<0.000000e+00> : vector<1x120xf32>
    %95 = tpu.matmul %92, %94, %cst_110 {dimension_numbers = #tpu.dot_dimension_numbers<[1], [0], [0], [1], [0, 0, 1, 1], [], []>} : vector<1x30xf32>, vector<30x120xf32>, vector<1x120xf32> -> vector<1x120xf32>
    %96 = arith.addf %91, %95 : vector<1x120xf32>
    %c0_111 = arith.constant 0 : index
    %c0_112 = arith.constant 0 : index
    %97 = vector.load %arg11[%c0_111, %c0_112] : memref<1x120xf32, #tpu.memory_space<vmem>>, vector<1x120xf32>
    %98 = arith.addf %96, %97 : vector<1x120xf32>
    %cst_113 = arith.constant 0.000000e+00 : f32
    %99 = vector.broadcast %cst_113 : f32 to vector<1x120xf32>
    %100 = arith.maximumf %98, %99 : vector<1x120xf32>
    %c0_114 = arith.constant 0 : index
    %c0_115 = arith.constant 0 : index
    %101 = vector.load %arg12[%c0_114, %c0_115] : memref<120x84xf32, #tpu.memory_space<vmem>>, vector<120x84xf32>
    %cst_116 = arith.constant dense<0.000000e+00> : vector<1x84xf32>
    %102 = tpu.matmul %100, %101, %cst_116 {dimension_numbers = #tpu.dot_dimension_numbers<[1], [0], [0], [1], [0, 0, 1, 1], [], []>} : vector<1x120xf32>, vector<120x84xf32>, vector<1x84xf32> -> vector<1x84xf32>
    %c0_117 = arith.constant 0 : index
    %c0_118 = arith.constant 0 : index
    %103 = vector.load %arg13[%c0_117, %c0_118] : memref<1x84xf32, #tpu.memory_space<vmem>>, vector<1x84xf32>
    %104 = arith.addf %102, %103 : vector<1x84xf32>
    %cst_119 = arith.constant 0.000000e+00 : f32
    %105 = vector.broadcast %cst_119 : f32 to vector<1x84xf32>
    %106 = arith.maximumf %104, %105 : vector<1x84xf32>
    %c0_120 = arith.constant 0 : index
    %c0_121 = arith.constant 0 : index
    %107 = vector.load %arg14[%c0_120, %c0_121] : memref<84x100xf32, #tpu.memory_space<vmem>>, vector<84x100xf32>
    %cst_122 = arith.constant dense<0.000000e+00> : vector<1x100xf32>
    %108 = tpu.matmul %106, %107, %cst_122 {dimension_numbers = #tpu.dot_dimension_numbers<[1], [0], [0], [1], [0, 0, 1, 1], [], []>} : vector<1x84xf32>, vector<84x100xf32>, vector<1x100xf32> -> vector<1x100xf32>
    %c0_123 = arith.constant 0 : index
    %c0_124 = arith.constant 0 : index
    %109 = vector.load %arg15[%c0_123, %c0_124] : memref<1x100xf32, #tpu.memory_space<vmem>>, vector<1x100xf32>
    %110 = arith.addf %108, %109 : vector<1x100xf32>
    %c0_125 = arith.constant 0 : index
    %c0_126 = arith.constant 0 : index
    %c0_127 = arith.constant 0 : index
    %111 = vector.load %arg16[%c0_125, %c0_126, %c0_127] : memref<1x1x100xf32, #tpu.memory_space<vmem>>, vector<1x1x100xf32>
    %112 = vector.shape_cast %111 : vector<1x1x100xf32> to vector<1x100xf32>
    %113 = vector.shape_cast %110 : vector<1x100xf32> to vector<1x1x100xf32>
    tpu.vector_store %arg16[%c0_125, %c0_126, %c0_127], %113 {strides = array<i32>} : memref<1x1x100xf32, #tpu.memory_space<vmem>>, vector<1x1x100xf32>,
    return
  }
  func.func @transform_0(%arg0: i32) -> (i32, i32, i32) {
    %c0_i32 = arith.constant 0 : i32
    %c0_i32_0 = arith.constant 0 : i32
    %c0_i32_1 = arith.constant 0 : i32
    return %arg0, %c0_i32, %c0_i32_0 : i32, i32, i32
  }
  func.func @transform_1(%arg0: i32) -> (i32, i32, i32) {
    %c0_i32 = arith.constant 0 : i32
    %c0_i32_0 = arith.constant 0 : i32
    %c0_i32_1 = arith.constant 0 : i32
    %c0_i32_2 = arith.constant 0 : i32
    return %c0_i32, %c0_i32_0, %c0_i32_1 : i32, i32, i32
  }
  func.func @transform_2(%arg0: i32) -> (i32, i32) {
    %c0_i32 = arith.constant 0 : i32
    %c0_i32_0 = arith.constant 0 : i32
    %c0_i32_1 = arith.constant 0 : i32
    return %c0_i32, %c0_i32_0 : i32, i32
  }
  func.func @transform_3(%arg0: i32) -> (i32, i32) {
    %c0_i32 = arith.constant 0 : i32
    %c0_i32_0 = arith.constant 0 : i32
    %c0_i32_1 = arith.constant 0 : i32
    return %c0_i32, %c0_i32_0 : i32, i32
  }
  func.func @transform_4(%arg0: i32) -> (i32, i32) {
    %c0_i32 = arith.constant 0 : i32
    %c0_i32_0 = arith.constant 0 : i32
    %c0_i32_1 = arith.constant 0 : i32
    return %c0_i32, %c0_i32_0 : i32, i32
  }
  func.func @transform_5(%arg0: i32) -> (i32, i32, i32) {
    %c0_i32 = arith.constant 0 : i32
    %c0_i32_0 = arith.constant 0 : i32
    %c0_i32_1 = arith.constant 0 : i32
    %c0_i32_2 = arith.constant 0 : i32
    return %c0_i32, %c0_i32_0, %c0_i32_1 : i32, i32, i32
  }
  func.func @transform_6(%arg0: i32) -> (i32, i32) {
    %c0_i32 = arith.constant 0 : i32
    %c0_i32_0 = arith.constant 0 : i32
    %c0_i32_1 = arith.constant 0 : i32
    return %c0_i32, %c0_i32_0 : i32, i32
  }
  func.func @transform_7(%arg0: i32) -> (i32, i32) {
    %c0_i32 = arith.constant 0 : i32
    %c0_i32_0 = arith.constant 0 : i32
    %c0_i32_1 = arith.constant 0 : i32
    return %c0_i32, %c0_i32_0 : i32, i32
  }
  func.func @transform_8(%arg0: i32) -> (i32, i32) {
    %c0_i32 = arith.constant 0 : i32
    %c0_i32_0 = arith.constant 0 : i32
    %c0_i32_1 = arith.constant 0 : i32
    return %c0_i32, %c0_i32_0 : i32, i32
  }
  func.func @transform_9(%arg0: i32) -> (i32, i32, i32) {
    %c0_i32 = arith.constant 0 : i32
    %c0_i32_0 = arith.constant 0 : i32
    %c0_i32_1 = arith.constant 0 : i32
    %c0_i32_2 = arith.constant 0 : i32
    return %c0_i32, %c0_i32_0, %c0_i32_1 : i32, i32, i32
  }
  func.func @transform_10(%arg0: i32) -> (i32, i32) {
    %c0_i32 = arith.constant 0 : i32
    %c0_i32_0 = arith.constant 0 : i32
    %c0_i32_1 = arith.constant 0 : i32
    return %c0_i32, %c0_i32_0 : i32, i32
  }
  func.func @transform_11(%arg0: i32) -> (i32, i32) {
    %c0_i32 = arith.constant 0 : i32
    %c0_i32_0 = arith.constant 0 : i32
    %c0_i32_1 = arith.constant 0 : i32
    return %c0_i32, %c0_i32_0 : i32, i32
  }
  func.func @transform_12(%arg0: i32) -> (i32, i32) {
    %c0_i32 = arith.constant 0 : i32
    %c0_i32_0 = arith.constant 0 : i32
    %c0_i32_1 = arith.constant 0 : i32
    return %c0_i32, %c0_i32_0 : i32, i32
  }
  func.func @transform_13(%arg0: i32) -> (i32, i32) {
    %c0_i32 = arith.constant 0 : i32
    %c0_i32_0 = arith.constant 0 : i32
    %c0_i32_1 = arith.constant 0 : i32
    return %c0_i32, %c0_i32_0 : i32, i32
  }
  func.func @transform_14(%arg0: i32) -> (i32, i32) {
    %c0_i32 = arith.constant 0 : i32
    %c0_i32_0 = arith.constant 0 : i32
    %c0_i32_1 = arith.constant 0 : i32
    return %c0_i32, %c0_i32_0 : i32, i32
  }
  func.func @transform_15(%arg0: i32) -> (i32, i32, i32) {
    %c0_i32 = arith.constant 0 : i32
    %c0_i32_0 = arith.constant 0 : i32
    %c0_i32_1 = arith.constant 0 : i32
    return %arg0, %c0_i32, %c0_i32_0 : i32, i32, i32
  }
}

</mosaic_0001>

<llo_original>
// kernel: lenet_forward.1
$region0: #{lenet_forward.1}
  #allocation0 [shape = 'u32[]', space=smem, size = 0x4, offset = 0x4, fixed_abs, tag = 'smem constant byte address 0x4 - core index']
  #allocation1 [shape = 'u32[144,128]{1,0:T(1,128)}', space=vmem, size = 0x12000, scoped, tag = 'internal scratch']
  #allocation2 [shape = 'f32[14,84]{1,0:T(8,128)}', space=vmem, size = 0x2000, scoped, tag = 'scratch operand']
  #allocation3 [shape = 'f32[5,30]{1,0:T(8,128)}', space=vmem, size = 0x1000, scoped, tag = 'scratch operand']
  %s0 = inlined_call_operand.hbm [shape: f32[2,32,32], index: 0, kind: input, shape index: {}]
  %s1 = inlined_call_operand.vmem [shape: f32[5,32,168], index: 1, kind: input, shape index: {}]
  %s2 = inlined_call_operand.vmem [shape: f32[1,168], index: 2, kind: input, shape index: {}]
  %s3 = inlined_call_operand.vmem [shape: f32[14,28], index: 3, kind: input, shape index: {}]
  %s4 = inlined_call_operand.vmem [shape: f32[168,84], index: 4, kind: input, shape index: {}]
  %s5 = inlined_call_operand.vmem [shape: f32[5,84,60], index: 5, kind: input, shape index: {}]
  %s6 = inlined_call_operand.vmem [shape: f32[1,60], index: 6, kind: input, shape index: {}]
  %s7 = inlined_call_operand.vmem [shape: f32[5,10], index: 7, kind: input, shape index: {}]
  %s8 = inlined_call_operand.vmem [shape: f32[60,30], index: 8, kind: input, shape index: {}]
  %s9 = inlined_call_operand.vmem [shape: f32[5,30,120], index: 9, kind: input, shape index: {}]
  %s10 = inlined_call_operand.vmem [shape: f32[1,120], index: 10, kind: input, shape index: {}]
  %s11 = inlined_call_operand.vmem [shape: f32[120,84], index: 11, kind: input, shape index: {}]
  %s12 = inlined_call_operand.vmem [shape: f32[1,84], index: 12, kind: input, shape index: {}]
  %s13 = inlined_call_operand.vmem [shape: f32[84,100], index: 13, kind: input, shape index: {}]
  %s14 = inlined_call_operand.vmem [shape: f32[1,100], index: 14, kind: input, shape index: {}]
  %s15 = inlined_call_operand.hbm [shape: f32[2,1,100], index: 15, kind: output, shape index: {}]
  %s16 = sld [smem:[#allocation0]]
  $region97: #{lenet_forward.1} parent=0
    _
  %s18 = ssub.s32 1, %s16
  %s19 = scalar_select 0, %s18, %s16
  $region1: #{lenet_forward.1} parent=0
    #allocation4 [shape = 'u8[32768]{0}', space=vmem, size = 0x8000, scoped, tag = 'input window, operand 0']
    #allocation5 [shape = 's32[2]{0}', space=sflag, size = 0x8, scoped, tag = 'scoped memory for lenet_forward.1']
    #allocation6 [shape = 's32[2]{0}', space=sflag, size = 0x8, scoped, tag = 'scoped memory for lenet_forward.1']
    #allocation7 [shape = 'u8[1024]{0}', space=vmem, size = 0x400, scoped, tag = 'output window, operand 0']
    %20 = vsyncpa [#allocation5], 0
    %s21 = scalar_lea.sflag [#allocation5], 1
    %22 = vsyncpa %s21, 0
    %23 = vsyncpa [#allocation6], 0
    %s24 = scalar_lea.sflag [#allocation6], 1
    %25 = vsyncpa %s24, 0
    loop: start=0, step=1, limit=4
    $region2: #{lenet_forward.1} parent=1 // loop_pre_header
      _
    $region3: #{lenet_forward.1} parent=1 // loop_header
      %s27 = sphi 0, %s31
      %p28 = scmp.ge.s32.totalorder %s27, 4
      %s37 = sphi 0, %s39
      %s40 = sphi 0, %s37
      %s41 = sphi 0, %s40
      %s57 = sphi 0, %s41
      %s61 = sphi 0, %s61
      %s63 = sphi 0, %s61
      %s64 = sphi 0, %s63
      %s78 = sphi 0, %s64
      %s82 = sphi 0, %s82
      %s84 = sphi 0, %s82
      %s85 = sphi 0, %s84
      %s99 = sphi 0, %s85
      %s103 = sphi 0, %s103
      %s105 = sphi 0, %s103
      %s106 = sphi 0, %s105
      %s120 = sphi 0, %s106
      %s124 = sphi 0, %s124
      %s126 = sphi 0, %s124
      %s127 = sphi 0, %s126
      %s141 = sphi 0, %s127
      %s145 = sphi 0, %s145
      %s147 = sphi 0, %s145
      %s148 = sphi 0, %s147
      %s162 = sphi 0, %s148
      %s166 = sphi 0, %s166
      %s168 = sphi 0, %s166
      %s169 = sphi 0, %s168
      %s183 = sphi 0, %s169
      %s187 = sphi 0, %s187
      %s189 = sphi 0, %s187
      %s190 = sphi 0, %s189
      %s204 = sphi 0, %s190
      %s208 = sphi 0, %s208
      %s210 = sphi 0, %s208
      %s211 = sphi 0, %s210
      %s225 = sphi 0, %s211
      %s229 = sphi 0, %s229
      %s231 = sphi 0, %s229
      %s232 = sphi 0, %s231
      %s246 = sphi 0, %s232
      %s250 = sphi 0, %s250
      %s252 = sphi 0, %s250
      %s253 = sphi 0, %s252
      %s267 = sphi 0, %s253
      %s271 = sphi 0, %s271
      %s273 = sphi 0, %s271
      %s274 = sphi 0, %s273
      %s288 = sphi 0, %s274
      %s292 = sphi 0, %s292
      %s294 = sphi 0, %s292
      %s295 = sphi 0, %s294
      %s309 = sphi 0, %s295
      %s313 = sphi 0, %s313
      %s315 = sphi 0, %s313
      %s316 = sphi 0, %s315
      %s330 = sphi 0, %s316
      %s334 = sphi 0, %s334
      %s336 = sphi 0, %s334
      %s337 = sphi 0, %s336
      %s351 = sphi 0, %s337
      %s357 = sphi 0, %s359
      %s360 = sphi 0, %s357
      %s361 = sphi 0, %s360
      %s377 = sphi 0, %s361
    $region4: #{lenet_forward.1} parent=1 // loop_header_branch
      %30 = sbr.rel (%p28) target = $region8
    $region5: #{lenet_forward.1} parent=1 // loop_body
      %s32 = ssub.s32 %s27, 1
      %s33 = ssub.s32 %s27, 2
      %s34 = sadd.s32 %s27, 1
      %s35 = ssub.s32 %s27, %s34
      %p36 = scmp.eq.s32.totalorder %s35, 0
      %s38 = sadd.s32 %s37, 1
      %s39 = scalar_select %p36, %s37, %s38
      %p42 = pneg %p36
      %p43 = scmp.eq.s32.totalorder %s27, 1
      %p44 = por %p42, %p43
      %p45 = scmp.ne.s32.totalorder %s37, %s40
      %p46 = scmp.eq.s32.totalorder %s27, 0
      %p47 = por %p45, %p46
      %p48 = scmp.ne.s32.totalorder %s37, %s40
      %p49 = scmp.eq.s32.totalorder %s32, 1
      %p50 = por %p48, %p49
      %p51 = scmp.ne.s32.totalorder %s40, %s41
      %p52 = scmp.eq.s32.totalorder %s32, 0
      %p53 = por %p51, %p52
      %p54 = scmp.ne.s32.totalorder %s40, %s41
      %p55 = scmp.eq.s32.totalorder %s33, 1
      %p56 = por %p54, %p55
      %p58 = scmp.ne.s32.totalorder %s41, %s57
      %p59 = scmp.eq.s32.totalorder %s33, 0
      %p60 = por %p58, %p59
      %s62 = sadd.s32 %s61, 1
      %p65 = scmp.eq.s32.totalorder %s27, 1
      %p66 = scmp.ne.s32.totalorder %s61, %s63
      %p67 = scmp.eq.s32.totalorder %s27, 0
      %p68 = por %p66, %p67
      %p69 = scmp.ne.s32.totalorder %s61, %s63
      %p70 = scmp.eq.s32.totalorder %s32, 1
      %p71 = por %p69, %p70
      %p72 = scmp.ne.s32.totalorder %s63, %s64
      %p73 = scmp.eq.s32.totalorder %s32, 0
      %p74 = por %p72, %p73
      %p75 = scmp.ne.s32.totalorder %s63, %s64
      %p76 = scmp.eq.s32.totalorder %s33, 1
      %p77 = por %p75, %p76
      %p79 = scmp.ne.s32.totalorder %s64, %s78
      %p80 = scmp.eq.s32.totalorder %s33, 0
      %p81 = por %p79, %p80
      %s83 = sadd.s32 %s82, 1
      %p86 = scmp.eq.s32.totalorder %s27, 1
      %p87 = scmp.ne.s32.totalorder %s82, %s84
      %p88 = scmp.eq.s32.totalorder %s27, 0
      %p89 = por %p87, %p88
      %p90 = scmp.ne.s32.totalorder %s82, %s84
      %p91 = scmp.eq.s32.totalorder %s32, 1
      %p92 = por %p90, %p91
      %p93 = scmp.ne.s32.totalorder %s84, %s85
      %p94 = scmp.eq.s32.totalorder %s32, 0
      %p95 = por %p93, %p94
      %p96 = scmp.ne.s32.totalorder %s84, %s85
      %p97 = scmp.eq.s32.totalorder %s33, 1
      %p98 = por %p96, %p97
      %p100 = scmp.ne.s32.totalorder %s85, %s99
      %p101 = scmp.eq.s32.totalorder %s33, 0
      %p102 = por %p100, %p101
      %s104 = sadd.s32 %s103, 1
      %p107 = scmp.eq.s32.totalorder %s27, 1
      %p108 = scmp.ne.s32.totalorder %s103, %s105
      %p109 = scmp.eq.s32.totalorder %s27, 0
      %p110 = por %p108, %p109
      %p111 = scmp.ne.s32.totalorder %s103, %s105
      %p112 = scmp.eq.s32.totalorder %s32, 1
      %p113 = por %p111, %p112
      %p114 = scmp.ne.s32.totalorder %s105, %s106
      %p115 = scmp.eq.s32.totalorder %s32, 0
      %p116 = por %p114, %p115
      %p117 = scmp.ne.s32.totalorder %s105, %s106
      %p118 = scmp.eq.s32.totalorder %s33, 1
      %p119 = por %p117, %p118
      %p121 = scmp.ne.s32.totalorder %s106, %s120
      %p122 = scmp.eq.s32.totalorder %s33, 0
      %p123 = por %p121, %p122
      %s125 = sadd.s32 %s124, 1
      %p128 = scmp.eq.s32.totalorder %s27, 1
      %p129 = scmp.ne.s32.totalorder %s124, %s126
      %p130 = scmp.eq.s32.totalorder %s27, 0
      %p131 = por %p129, %p130
      %p132 = scmp.ne.s32.totalorder %s124, %s126
      %p133 = scmp.eq.s32.totalorder %s32, 1
      %p134 = por %p132, %p133
      %p135 = scmp.ne.s32.totalorder %s126, %s127
      %p136 = scmp.eq.s32.totalorder %s32, 0
      %p137 = por %p135, %p136
      %p138 = scmp.ne.s32.totalorder %s126, %s127
      %p139 = scmp.eq.s32.totalorder %s33, 1
      %p140 = por %p138, %p139
      %p142 = scmp.ne.s32.totalorder %s127, %s141
      %p143 = scmp.eq.s32.totalorder %s33, 0
      %p144 = por %p142, %p143
      %s146 = sadd.s32 %s145, 1
      %p149 = scmp.eq.s32.totalorder %s27, 1
      %p150 = scmp.ne.s32.totalorder %s145, %s147
      %p151 = scmp.eq.s32.totalorder %s27, 0
      %p152 = por %p150, %p151
      %p153 = scmp.ne.s32.totalorder %s145, %s147
      %p154 = scmp.eq.s32.totalorder %s32, 1
      %p155 = por %p153, %p154
      %p156 = scmp.ne.s32.totalorder %s147, %s148
      %p157 = scmp.eq.s32.totalorder %s32, 0
      %p158 = por %p156, %p157
      %p159 = scmp.ne.s32.totalorder %s147, %s148
      %p160 = scmp.eq.s32.totalorder %s33, 1
      %p161 = por %p159, %p160
      %p163 = scmp.ne.s32.totalorder %s148, %s162
      %p164 = scmp.eq.s32.totalorder %s33, 0
      %p165 = por %p163, %p164
      %s167 = sadd.s32 %s166, 1
      %p170 = scmp.eq.s32.totalorder %s27, 1
      %p171 = scmp.ne.s32.totalorder %s166, %s168
      %p172 = scmp.eq.s32.totalorder %s27, 0
      %p173 = por %p171, %p172
      %p174 = scmp.ne.s32.totalorder %s166, %s168
      %p175 = scmp.eq.s32.totalorder %s32, 1
      %p176 = por %p174, %p175
      %p177 = scmp.ne.s32.totalorder %s168, %s169
      %p178 = scmp.eq.s32.totalorder %s32, 0
      %p179 = por %p177, %p178
      %p180 = scmp.ne.s32.totalorder %s168, %s169
      %p181 = scmp.eq.s32.totalorder %s33, 1
      %p182 = por %p180, %p181
      %p184 = scmp.ne.s32.totalorder %s169, %s183
      %p185 = scmp.eq.s32.totalorder %s33, 0
      %p186 = por %p184, %p185
      %s188 = sadd.s32 %s187, 1
      %p191 = scmp.eq.s32.totalorder %s27, 1
      %p192 = scmp.ne.s32.totalorder %s187, %s189
      %p193 = scmp.eq.s32.totalorder %s27, 0
      %p194 = por %p192, %p193
      %p195 = scmp.ne.s32.totalorder %s187, %s189
      %p196 = scmp.eq.s32.totalorder %s32, 1
      %p197 = por %p195, %p196
      %p198 = scmp.ne.s32.totalorder %s189, %s190
      %p199 = scmp.eq.s32.totalorder %s32, 0
      %p200 = por %p198, %p199
      %p201 = scmp.ne.s32.totalorder %s189, %s190
      %p202 = scmp.eq.s32.totalorder %s33, 1
      %p203 = por %p201, %p202
      %p205 = scmp.ne.s32.totalorder %s190, %s204
      %p206 = scmp.eq.s32.totalorder %s33, 0
      %p207 = por %p205, %p206
      %s209 = sadd.s32 %s208, 1
      %p212 = scmp.eq.s32.totalorder %s27, 1
      %p213 = scmp.ne.s32.totalorder %s208, %s210
      %p214 = scmp.eq.s32.totalorder %s27, 0
      %p215 = por %p213, %p214
      %p216 = scmp.ne.s32.totalorder %s208, %s210
      %p217 = scmp.eq.s32.totalorder %s32, 1
      %p218 = por %p216, %p217
      %p219 = scmp.ne.s32.totalorder %s210, %s211
      %p220 = scmp.eq.s32.totalorder %s32, 0
      %p221 = por %p219, %p220
      %p222 = scmp.ne.s32.totalorder %s210, %s211
      %p223 = scmp.eq.s32.totalorder %s33, 1
      %p224 = por %p222, %p223
      %p226 = scmp.ne.s32.totalorder %s211, %s225
      %p227 = scmp.eq.s32.totalorder %s33, 0
      %p228 = por %p226, %p227
      %s230 = sadd.s32 %s229, 1
      %p233 = scmp.eq.s32.totalorder %s27, 1
      %p234 = scmp.ne.s32.totalorder %s229, %s231
      %p235 = scmp.eq.s32.totalorder %s27, 0
      %p236 = por %p234, %p235
      %p237 = scmp.ne.s32.totalorder %s229, %s231
      %p238 = scmp.eq.s32.totalorder %s32, 1
      %p239 = por %p237, %p238
      %p240 = scmp.ne.s32.totalorder %s231, %s232
      %p241 = scmp.eq.s32.totalorder %s32, 0
      %p242 = por %p240, %p241
      %p243 = scmp.ne.s32.totalorder %s231, %s232
      %p244 = scmp.eq.s32.totalorder %s33, 1
      %p245 = por %p243, %p244
      %p247 = scmp.ne.s32.totalorder %s232, %s246
      %p248 = scmp.eq.s32.totalorder %s33, 0
      %p249 = por %p247, %p248
      %s251 = sadd.s32 %s250, 1
      %p254 = scmp.eq.s32.totalorder %s27, 1
      %p255 = scmp.ne.s32.totalorder %s250, %s252
      %p256 = scmp.eq.s32.totalorder %s27, 0
      %p257 = por %p255, %p256
      %p258 = scmp.ne.s32.totalorder %s250, %s252
      %p259 = scmp.eq.s32.totalorder %s32, 1
      %p260 = por %p258, %p259
      %p261 = scmp.ne.s32.totalorder %s252, %s253
      %p262 = scmp.eq.s32.totalorder %s32, 0
      %p263 = por %p261, %p262
      %p264 = scmp.ne.s32.totalorder %s252, %s253
      %p265 = scmp.eq.s32.totalorder %s33, 1
      %p266 = por %p264, %p265
      %p268 = scmp.ne.s32.totalorder %s253, %s267
      %p269 = scmp.eq.s32.totalorder %s33, 0
      %p270 = por %p268, %p269
      %s272 = sadd.s32 %s271, 1
      %p275 = scmp.eq.s32.totalorder %s27, 1
      %p276 = scmp.ne.s32.totalorder %s271, %s273
      %p277 = scmp.eq.s32.totalorder %s27, 0
      %p278 = por %p276, %p277
      %p279 = scmp.ne.s32.totalorder %s271, %s273
      %p280 = scmp.eq.s32.totalorder %s32, 1
      %p281 = por %p279, %p280
      %p282 = scmp.ne.s32.totalorder %s273, %s274
      %p283 = scmp.eq.s32.totalorder %s32, 0
      %p284 = por %p282, %p283
      %p285 = scmp.ne.s32.totalorder %s273, %s274
      %p286 = scmp.eq.s32.totalorder %s33, 1
      %p287 = por %p285, %p286
      %p289 = scmp.ne.s32.totalorder %s274, %s288
      %p290 = scmp.eq.s32.totalorder %s33, 0
      %p291 = por %p289, %p290
      %s293 = sadd.s32 %s292, 1
      %p296 = scmp.eq.s32.totalorder %s27, 1
      %p297 = scmp.ne.s32.totalorder %s292, %s294
      %p298 = scmp.eq.s32.totalorder %s27, 0
      %p299 = por %p297, %p298
      %p300 = scmp.ne.s32.totalorder %s292, %s294
      %p301 = scmp.eq.s32.totalorder %s32, 1
      %p302 = por %p300, %p301
      %p303 = scmp.ne.s32.totalorder %s294, %s295
      %p304 = scmp.eq.s32.totalorder %s32, 0
      %p305 = por %p303, %p304
      %p306 = scmp.ne.s32.totalorder %s294, %s295
      %p307 = scmp.eq.s32.totalorder %s33, 1
      %p308 = por %p306, %p307
      %p310 = scmp.ne.s32.totalorder %s295, %s309
      %p311 = scmp.eq.s32.totalorder %s33, 0
      %p312 = por %p310, %p311
      %s314 = sadd.s32 %s313, 1
      %p317 = scmp.eq.s32.totalorder %s27, 1
      %p318 = scmp.ne.s32.totalorder %s313, %s315
      %p319 = scmp.eq.s32.totalorder %s27, 0
      %p320 = por %p318, %p319
      %p321 = scmp.ne.s32.totalorder %s313, %s315
      %p322 = scmp.eq.s32.totalorder %s32, 1
      %p323 = por %p321, %p322
      %p324 = scmp.ne.s32.totalorder %s315, %s316
      %p325 = scmp.eq.s32.totalorder %s32, 0
      %p326 = por %p324, %p325
      %p327 = scmp.ne.s32.totalorder %s315, %s316
      %p328 = scmp.eq.s32.totalorder %s33, 1
      %p329 = por %p327, %p328
      %p331 = scmp.ne.s32.totalorder %s316, %s330
      %p332 = scmp.eq.s32.totalorder %s33, 0
      %p333 = por %p331, %p332
      %s335 = sadd.s32 %s334, 1
      %p338 = scmp.eq.s32.totalorder %s27, 1
      %p339 = scmp.ne.s32.totalorder %s334, %s336
      %p340 = scmp.eq.s32.totalorder %s27, 0
      %p341 = por %p339, %p340
      %p342 = scmp.ne.s32.totalorder %s334, %s336
      %p343 = scmp.eq.s32.totalorder %s32, 1
      %p344 = por %p342, %p343
      %p345 = scmp.ne.s32.totalorder %s336, %s337
      %p346 = scmp.eq.s32.totalorder %s32, 0
      %p347 = por %p345, %p346
      %p348 = scmp.ne.s32.totalorder %s336, %s337
      %p349 = scmp.eq.s32.totalorder %s33, 1
      %p350 = por %p348, %p349
      %p352 = scmp.ne.s32.totalorder %s337, %s351
      %p353 = scmp.eq.s32.totalorder %s33, 0
      %p354 = por %p352, %p353
      %s355 = ssub.s32 %s27, %s34
      %p356 = scmp.eq.s32.totalorder %s355, 0
      %s358 = sadd.s32 %s357, 1
      %s359 = scalar_select %p356, %s357, %s358
      %p362 = pneg %p356
      %p363 = scmp.eq.s32.totalorder %s27, 1
      %p364 = por %p362, %p363
      %p365 = scmp.ne.s32.totalorder %s357, %s360
      %p366 = scmp.eq.s32.totalorder %s27, 0
      %p367 = por %p365, %p366
      %p368 = scmp.ne.s32.totalorder %s357, %s360
      %p369 = scmp.eq.s32.totalorder %s32, 1
      %p370 = por %p368, %p369
      %p371 = scmp.ne.s32.totalorder %s360, %s361
      %p372 = scmp.eq.s32.totalorder %s32, 0
      %p373 = por %p371, %p372
      %p374 = scmp.ne.s32.totalorder %s360, %s361
      %p375 = scmp.eq.s32.totalorder %s33, 1
      %p376 = por %p374, %p375
      %p378 = scmp.ne.s32.totalorder %s361, %s377
      %p379 = scmp.eq.s32.totalorder %s33, 0
      %p380 = por %p378, %p379
      %p381 = scmp.le.s32.totalorder 1, %s27
      %p382 = scmp.lt.s32.totalorder %s27, 3
      %p383 = pnand %p381, %p382
      %p384 = pneg %p383
      // Predicated region
      $region9: #{lenet_forward.1} parent=5 // pred_check
        _
      $region10: #{lenet_forward.1} parent=5 // pred_check_branch
        %386 = sbr.rel (%p383) target = $region12
      $region11: #{lenet_forward.1} parent=5 // pred_region
        %s387 = ssub.s32 %s27, 1
        // Predicated region
        $region13: #{lenet_forward.1} parent=11 // pred_check
          %p388 = pneg %p74
        $region14: #{lenet_forward.1} parent=11 // pred_check_branch
          %390 = sbr.rel (%p388) target = $region16
        $region15: #{lenet_forward.1} parent=11 // pred_region
          _
        $region16: #{lenet_forward.1} parent=11 // pred_fallthru
          _
        // Predicated region
        $region17: #{lenet_forward.1} parent=11 // pred_check
          %p391 = pneg %p95
        $region18: #{lenet_forward.1} parent=11 // pred_check_branch
          %393 = sbr.rel (%p391) target = $region20
        $region19: #{lenet_forward.1} parent=11 // pred_region
          _
        $region20: #{lenet_forward.1} parent=11 // pred_fallthru
          _
        // Predicated region
        $region21: #{lenet_forward.1} parent=11 // pred_check
          %p394 = pneg %p116
        $region22: #{lenet_forward.1} parent=11 // pred_check_branch
          %396 = sbr.rel (%p394) target = $region24
        $region23: #{lenet_forward.1} parent=11 // pred_region
          _
        $region24: #{lenet_forward.1} parent=11 // pred_fallthru
          _
        // Predicated region
        $region25: #{lenet_forward.1} parent=11 // pred_check
          %p397 = pneg %p137
        $region26: #{lenet_forward.1} parent=11 // pred_check_branch
          %399 = sbr.rel (%p397) target = $region28
        $region27: #{lenet_forward.1} parent=11 // pred_region
          _
        $region28: #{lenet_forward.1} parent=11 // pred_fallthru
          _
        // Predicated region
        $region29: #{lenet_forward.1} parent=11 // pred_check
          %p400 = pneg %p158
        $region30: #{lenet_forward.1} parent=11 // pred_check_branch
          %402 = sbr.rel (%p400) target = $region32
        $region31: #{lenet_forward.1} parent=11 // pred_region
          _
        $region32: #{lenet_forward.1} parent=11 // pred_fallthru
          _
        // Predicated region
        $region33: #{lenet_forward.1} parent=11 // pred_check
          %p403 = pneg %p179
        $region34: #{lenet_forward.1} parent=11 // pred_check_branch
          %405 = sbr.rel (%p403) target = $region36
        $region35: #{lenet_forward.1} parent=11 // pred_region
          _
        $region36: #{lenet_forward.1} parent=11 // pred_fallthru
          _
        // Predicated region
        $region37: #{lenet_forward.1} parent=11 // pred_check
          %p406 = pneg %p200
        $region38: #{lenet_forward.1} parent=11 // pred_check_branch
          %408 = sbr.rel (%p406) target = $region40
        $region39: #{lenet_forward.1} parent=11 // pred_region
          _
        $region40: #{lenet_forward.1} parent=11 // pred_fallthru
          _
        // Predicated region
        $region41: #{lenet_forward.1} parent=11 // pred_check
          %p409 = pneg %p221
        $region42: #{lenet_forward.1} parent=11 // pred_check_branch
          %411 = sbr.rel (%p409) target = $region44
        $region43: #{lenet_forward.1} parent=11 // pred_region
          _
        $region44: #{lenet_forward.1} parent=11 // pred_fallthru
          _
        // Predicated region
        $region45: #{lenet_forward.1} parent=11 // pred_check
          %p412 = pneg %p242
        $region46: #{lenet_forward.1} parent=11 // pred_check_branch
          %414 = sbr.rel (%p412) target = $region48
        $region47: #{lenet_forward.1} parent=11 // pred_region
          _
        $region48: #{lenet_forward.1} parent=11 // pred_fallthru
          _
        // Predicated region
        $region49: #{lenet_forward.1} parent=11 // pred_check
          %p415 = pneg %p263
        $region50: #{lenet_forward.1} parent=11 // pred_check_branch
          %417 = sbr.rel (%p415) target = $region52
        $region51: #{lenet_forward.1} parent=11 // pred_region
          _
        $region52: #{lenet_forward.1} parent=11 // pred_fallthru
          _
        // Predicated region
        $region53: #{lenet_forward.1} parent=11 // pred_check
          %p418 = pneg %p284
        $region54: #{lenet_forward.1} parent=11 // pred_check_branch
          %420 = sbr.rel (%p418) target = $region56
        $region55: #{lenet_forward.1} parent=11 // pred_region
          _
        $region56: #{lenet_forward.1} parent=11 // pred_fallthru
          _
        // Predicated region
        $region57: #{lenet_forward.1} parent=11 // pred_check
          %p421 = pneg %p305
        $region58: #{lenet_forward.1} parent=11 // pred_check_branch
          %423 = sbr.rel (%p421) target = $region60
        $region59: #{lenet_forward.1} parent=11 // pred_region
          _
        $region60: #{lenet_forward.1} parent=11 // pred_fallthru
          _
        // Predicated region
        $region61: #{lenet_forward.1} parent=11 // pred_check
          %p424 = pneg %p326
        $region62: #{lenet_forward.1} parent=11 // pred_check_branch
          %426 = sbr.rel (%p424) target = $region64
        $region63: #{lenet_forward.1} parent=11 // pred_region
          _
        $region64: #{lenet_forward.1} parent=11 // pred_fallthru
          _
        // Predicated region
        $region65: #{lenet_forward.1} parent=11 // pred_check
          %p427 = pneg %p347
        $region66: #{lenet_forward.1} parent=11 // pred_check_branch
          %429 = sbr.rel (%p427) target = $region68
        $region67: #{lenet_forward.1} parent=11 // pred_region
          _
        $region68: #{lenet_forward.1} parent=11 // pred_fallthru
          _
      $region12: #{lenet_forward.1} parent=5 // pred_fallthru
        _
      %p430 = scmp.lt.s32.totalorder %s27, 2
      // Predicated region
      $region69: #{lenet_forward.1} parent=5 // pred_check
        %p431 = pneg %p430
      $region70: #{lenet_forward.1} parent=5 // pred_check_branch
        %433 = sbr.rel (%p431) target = $region72
      $region71: #{lenet_forward.1} parent=5 // pred_region
        // Predicated region
        $region73: #{lenet_forward.1} parent=71 // pred_check
          %p434 = pneg %p47
        $region74: #{lenet_forward.1} parent=71 // pred_check_branch
          %436 = sbr.rel (%p434) target = $region76
        $region75: #{lenet_forward.1} parent=71 // pred_region
          %s437 = sand.u32 %s37, 1
          %s438 = scalar_lea.sflag [#allocation5], %s437
          %s439 = sand.u32 %s37, 1
          %s440 = smul.addr %s439, 32
          %s441 = scalar_lea.vmem [#allocation4], %s440
          %s443 = ssub.s32 512, 512
          %444 = vsyncadd %s438, %s443
          %s445 = smul.addr %s27, 4
          %s446 = smul.addr %s445, 128
          %s447 = scalar_lea.hbm %s0, %s446
          %s448 = sshll.u32 %s441, 4
          %s449 = int_to_ptr.vmem [resolvable:$true] %s448
          %454 = dma.hbm_to_vmem [thread:$0]  %s447, 512, %s449, %s438, 128, 128, 8
        $region76: #{lenet_forward.1} parent=71 // pred_fallthru
          _
      $region72: #{lenet_forward.1} parent=5 // pred_fallthru
        _
      %p455 = scmp.le.s32.totalorder 1, %s27
      %p456 = scmp.lt.s32.totalorder %s27, 3
      %p457 = pnand %p455, %p456
      %p458 = pneg %p457
      // Predicated region
      $region77: #{lenet_forward.1} parent=5 // pred_check
        _
      $region78: #{lenet_forward.1} parent=5 // pred_check_branch
        %460 = sbr.rel (%p457) target = $region80
      $region79: #{lenet_forward.1} parent=5 // pred_region
        %s461 = ssub.s32 %s27, 1
        %s462 = sand.u32 %s40, 1
        %s463 = scalar_lea.sflag [#allocation5], %s462
        %s464 = sand.u32 %s40, 1
        %s465 = smul.addr %s464, 32
        %s466 = scalar_lea.vmem [#allocation4], %s465
        // Predicated region
        $region81: #{lenet_forward.1} parent=79 // pred_check
          %p467 = pneg %p53
        $region82: #{lenet_forward.1} parent=79 // pred_check_branch
          %469 = sbr.rel (%p467) target = $region84
        $region83: #{lenet_forward.1} parent=79 // pred_region
          %470 = dma.done %s463, 512
        $region84: #{lenet_forward.1} parent=79 // pred_fallthru
          _
        %s471 = sand.u32 %s40, 1
        %s472 = scalar_lea.sflag [#allocation5], %s471
        %s473 = sand.u32 %s40, 1
        %s474 = smul.addr %s473, 32
        %s475 = scalar_lea.vmem [#allocation4], %s474
        %p476 = pneg %p53
        %p477 = pneg %p50
        %p478 = pneg %p74
        %p479 = pneg %p71
        %p480 = pneg %p95
        %p481 = pneg %p92
        %p482 = pneg %p116
        %p483 = pneg %p113
        %p484 = pneg %p137
        %p485 = pneg %p134
        %p486 = pneg %p158
        %p487 = pneg %p155
        %p488 = pneg %p179
        %p489 = pneg %p176
        %p490 = pneg %p200
        %p491 = pneg %p197
        %p492 = pneg %p221
        %p493 = pneg %p218
        %p494 = pneg %p242
        %p495 = pneg %p239
        %p496 = pneg %p263
        %p497 = pneg %p260
        %p498 = pneg %p284
        %p499 = pneg %p281
        %p500 = pneg %p305
        %p501 = pneg %p302
        %p502 = pneg %p326
        %p503 = pneg %p323
        %p504 = pneg %p347
        %p505 = pneg %p344
        %p506 = pneg %p373
        %p507 = pneg %p370
        %s508 = sand.u32 %s360, 1
        %s509 = scalar_lea.sflag [#allocation6], %s508
        %s510 = sand.u32 %s360, 1
        %s511 = scalar_lea.vmem [#allocation7], %s510
        %v512 = vld [vmem:[%s466] sm:$0xff]
        %v513 = vld [vmem:[%s466 + $0x8] sm:$0xff]
        %v514 = vld [vmem:[%s466 + $0x10] sm:$0xff]
        %v515 = vld [vmem:[%s466 + $0x18] sm:$0xf]
        %v516 = vld [vmem:[%s1] sm:$0xff]
        %v517 = vld [vmem:[%s1 + $0x8] sm:$0xff]
        %v518 = vld [vmem:[%s1 + $0x10] sm:$0xff]
        %v519 = vld [vmem:[%s1 + $0x18] sm:$0xff]
        %v520 = vld [vmem:[%s1 + $0x20] sm:$0xff]
        %v521 = vld [vmem:[%s1 + $0x28] sm:$0xff]
        %v522 = vld [vmem:[%s1 + $0x30] sm:$0xff]
        %v523 = vld [vmem:[%s1 + $0x38] sm:$0xff]
        %v524 = vld [vmem:[%s466 + $0x1] sm:$0xff]
        %v525 = vld [vmem:[%s466 + $0x9] sm:$0xff]
        %v526 = vld [vmem:[%s466 + $0x11] sm:$0xff]
        %v527 = vld [vmem:[%s466 + $0x19] sm:$0xf]
        %s528 = scalar_lea.vmem %s1, 64
        %v529 = vld [vmem:[%s528] sm:$0xff]
        %v530 = vld [vmem:[%s528 + $0x8] sm:$0xff]
        %v531 = vld [vmem:[%s528 + $0x10] sm:$0xff]
        %v532 = vld [vmem:[%s528 + $0x18] sm:$0xff]
        %v533 = vld [vmem:[%s528 + $0x20] sm:$0xff]
        %v534 = vld [vmem:[%s528 + $0x28] sm:$0xff]
        %v535 = vld [vmem:[%s528 + $0x30] sm:$0xff]
        %v536 = vld [vmem:[%s528 + $0x38] sm:$0xff]
        %vm537 = vcmask 261120
        %v539 = vsel %vm537, %v524, 0
        %v542 = vsel %vm537, %v525, 0
        %v545 = vsel %vm537, %v526, 0
        %v548 = vsel %vm537, %v527, 0
        %550 = vmatprep.subr.mxu0 %v530
        %551 = vmatpush1.msra.mxu0 %v529
        %552 = vmatprep.subr.mxu0 %v532
        %553 = vmatpush1.msra.mxu0 %v531
        %554 = vmatprep.subr.mxu0 %v534
        %555 = vmatpush1.msra.mxu0 %v533
        %556 = vmatprep.subr.mxu0 %v536
        %557 = vmatpush1.msra.mxu0 %v535
        %558 = vmatprep.subr.mxu0 0.0
        %559 = vmatpush1.msra.mxu0 0.0
        %560 = vmatprep.subr.mxu0 0.0
        %561 = vmatpush1.msra.mxu0 0.0
        %562 = vmatprep.subr.mxu0 0.0
        %563 = vmatpush1.msra.mxu0 0.0
        %564 = vmatprep.subr.mxu0 0.0
        %565 = vmatpush1.msra.mxu0 0.0
        %566 = vmatprep.subr.mxu0 0.0
        %567 = vmatpush1.msra.mxu0 0.0
        %568 = vmatprep.subr.mxu0 0.0
        %569 = vmatpush1.msra.mxu0 0.0
        %570 = vmatprep.subr.mxu0 0.0
        %571 = vmatpush1.msra.mxu0 0.0
        %572 = vmatprep.subr.mxu0 0.0
        %573 = vmatpush1.msra.mxu0 0.0
        %574 = vmatprep.subr.mxu0 0.0
        %575 = vmatpush1.msra.mxu0 0.0
        %576 = vmatprep.subr.mxu0 0.0
        %577 = vmatpush1.msra.mxu0 0.0
        %578 = vmatprep.subr.mxu0 0.0
        %579 = vmatpush1.msra.mxu0 0.0
        %580 = vmatprep.subr.mxu0 0.0
        %581 = vmatpush1.msra.mxu0 0.0
        %582 = vmatprep.subr.mxu0 0.0
        %583 = vmatpush1.msra.mxu0 0.0
        %584 = vmatprep.subr.mxu0 0.0
        %585 = vmatpush1.msra.mxu0 0.0
        %586 = vmatprep.subr.mxu0 0.0
        %587 = vmatpush1.msra.mxu0 0.0
        %588 = vmatprep.subr.mxu0 0.0
        %589 = vmatpush1.msra.mxu0 0.0
        %590 = vmatprep.subr.mxu0 0.0
        %591 = vmatpush1.msra.mxu0 0.0
        %592 = vmatprep.subr.mxu0 0.0
        %593 = vmatpush1.msra.mxu0 0.0
        %594 = vmatprep.subr.mxu0 0.0
        %595 = vmatpush1.msra.mxu0 0.0
        %596 = vmatprep.subr.mxu0 0.0
        %597 = vmatpush1.msra.mxu0 0.0
        %598 = vmatprep.subr.mxu0 0.0
        %599 = vmatpush1.msra.mxu0 0.0
        %600 = vmatprep.subr.mxu0 0.0
        %601 = vmatpush1.msra.mxu0 0.0
        %602 = vmatprep.subr.mxu0 0.0
        %603 = vmatpush1.msra.mxu0 0.0
        %604 = vmatprep.subr.mxu0 0.0
        %605 = vmatpush1.msra.mxu0 0.0
        %606 = vmatprep.subr.mxu0 0.0
        %607 = vmatpush1.msra.mxu0 0.0
        %608 = vmatprep.subr.mxu0 0.0
        %609 = vmatpush1.msra.mxu0 0.0
        %610 = vmatprep.subr.mxu0 0.0
        %611 = vmatpush1.msra.mxu0 0.0
        %612 = vmatprep.subr.mxu0 0.0
        %613 = vmatpush1.msra.mxu0 0.0
        %614 = vmatprep.mubr.f32.mxu0 0.0
        %615 = vmatmul.mubr.f32.gmra.mrb[0].mxu0 %v539
        %v616 = vpop.f32.mrb[0].mxu0
        %v617 = vadd.f32 0.0, %v616
        %v618 = vpop.f32.mrb[0].mxu0
        %v619 = vadd.f32 0.0, %v618
        %620 = vmatprep.mubr.f32.mxu0 0.0
        %621 = vmatmul.mubr.f32.gmra.mrb[0].mxu0 %v542
        %v622 = vpop.f32.mrb[0].mxu0
        %v623 = vadd.f32 0.0, %v622
        %v624 = vpop.f32.mrb[0].mxu0
        %v625 = vadd.f32 0.0, %v624
        %626 = vmatprep.mubr.f32.mxu0 0.0
        %627 = vmatmul.mubr.f32.gmra.mrb[0].mxu0 %v545
        %v628 = vpop.f32.mrb[0].mxu0
        %v629 = vadd.f32 0.0, %v628
        %v630 = vpop.f32.mrb[0].mxu0
        %v631 = vadd.f32 0.0, %v630
        %632 = vmatprep.mubr.f32.mxu0 0.0
        %633 = vmatmul.mubr.f32.gmra.mrb[0].mxu0 %v548
        %v634 = vpop.f32.mrb[0].mxu0
        %v635 = vadd.f32 0.0, %v634
        %v636 = vpop.f32.mrb[0].mxu0
        %v637 = vadd.f32 0.0, %v636
        %638 = vdwg.mxu0
        %v640 = vsel %vm537, %v512, 0
        %v643 = vsel %vm537, %v513, 0
        %v646 = vsel %vm537, %v514, 0
        %v649 = vsel %vm537, %v515, 0
        %651 = vmatprep.subr.mxu0 %v517
        %652 = vmatpush1.msra.mxu0 %v516
        %653 = vmatprep.subr.mxu0 %v519
        %654 = vmatpush1.msra.mxu0 %v518
        %655 = vmatprep.subr.mxu0 %v521
        %656 = vmatpush1.msra.mxu0 %v520
        %657 = vmatprep.subr.mxu0 %v523
        %658 = vmatpush1.msra.mxu0 %v522
        %659 = vmatprep.subr.mxu0 0.0
        %660 = vmatpush1.msra.mxu0 0.0
        %661 = vmatprep.subr.mxu0 0.0
        %662 = vmatpush1.msra.mxu0 0.0
        %663 = vmatprep.subr.mxu0 0.0
        %664 = vmatpush1.msra.mxu0 0.0
        %665 = vmatprep.subr.mxu0 0.0
        %666 = vmatpush1.msra.mxu0 0.0
        %667 = vmatprep.subr.mxu0 0.0
        %668 = vmatpush1.msra.mxu0 0.0
        %669 = vmatprep.subr.mxu0 0.0
        %670 = vmatpush1.msra.mxu0 0.0
        %671 = vmatprep.subr.mxu0 0.0
        %672 = vmatpush1.msra.mxu0 0.0
        %673 = vmatprep.subr.mxu0 0.0
        %674 = vmatpush1.msra.mxu0 0.0
        %675 = vmatprep.subr.mxu0 0.0
        %676 = vmatpush1.msra.mxu0 0.0
        %677 = vmatprep.subr.mxu0 0.0
        %678 = vmatpush1.msra.mxu0 0.0
        %679 = vmatprep.subr.mxu0 0.0
        %680 = vmatpush1.msra.mxu0 0.0
        %681 = vmatprep.subr.mxu0 0.0
        %682 = vmatpush1.msra.mxu0 0.0
        %683 = vmatprep.subr.mxu0 0.0
        %684 = vmatpush1.msra.mxu0 0.0
        %685 = vmatprep.subr.mxu0 0.0
        %686 = vmatpush1.msra.mxu0 0.0
        %687 = vmatprep.subr.mxu0 0.0
        %688 = vmatpush1.msra.mxu0 0.0
        %689 = vmatprep.subr.mxu0 0.0
        %690 = vmatpush1.msra.mxu0 0.0
        %691 = vmatprep.subr.mxu0 0.0
        %692 = vmatpush1.msra.mxu0 0.0
        %693 = vmatprep.subr.mxu0 0.0
        %694 = vmatpush1.msra.mxu0 0.0
        %695 = vmatprep.subr.mxu0 0.0
        %696 = vmatpush1.msra.mxu0 0.0
        %697 = vmatprep.subr.mxu0 0.0
        %698 = vmatpush1.msra.mxu0 0.0
        %699 = vmatprep.subr.mxu0 0.0
        %700 = vmatpush1.msra.mxu0 0.0
        %701 = vmatprep.subr.mxu0 0.0
        %702 = vmatpush1.msra.mxu0 0.0
        %703 = vmatprep.subr.mxu0 0.0
        %704 = vmatpush1.msra.mxu0 0.0
        %705 = vmatprep.subr.mxu0 0.0
        %706 = vmatpush1.msra.mxu0 0.0
        %707 = vmatprep.subr.mxu0 0.0
        %708 = vmatpush1.msra.mxu0 0.0
        %709 = vmatprep.subr.mxu0 0.0
        %710 = vmatpush1.msra.mxu0 0.0
        %711 = vmatprep.subr.mxu0 0.0
        %712 = vmatpush1.msra.mxu0 0.0
        %713 = vmatprep.subr.mxu0 0.0
        %714 = vmatpush1.msra.mxu0 0.0
        %715 = vmatprep.mubr.f32.mxu0 0.0
        %716 = vmatmul.mubr.f32.gmra.mrb[0].mxu0 %v640
        %v717 = vpop.f32.mrb[0].mxu0
        %v718 = vadd.f32 %v617, %v717
        %v719 = vpop.f32.mrb[0].mxu0
        %v720 = vadd.f32 %v619, %v719
        %721 = vmatprep.mubr.f32.mxu0 0.0
        %722 = vmatmul.mubr.f32.gmra.mrb[0].mxu0 %v643
        %v723 = vpop.f32.mrb[0].mxu0
        %v724 = vadd.f32 %v623, %v723
        %v725 = vpop.f32.mrb[0].mxu0
        %v726 = vadd.f32 %v625, %v725
        %727 = vmatprep.mubr.f32.mxu0 0.0
        %728 = vmatmul.mubr.f32.gmra.mrb[0].mxu0 %v646
        %v729 = vpop.f32.mrb[0].mxu0
        %v730 = vadd.f32 %v629, %v729
        %v731 = vpop.f32.mrb[0].mxu0
        %v732 = vadd.f32 %v631, %v731
        %733 = vmatprep.mubr.f32.mxu0 0.0
        %734 = vmatmul.mubr.f32.gmra.mrb[0].mxu0 %v649
        %v735 = vpop.f32.mrb[0].mxu0
        %v736 = vadd.f32 %v635, %v735
        %v737 = vpop.f32.mrb[0].mxu0
        %v738 = vadd.f32 %v637, %v737
        %739 = vdwg.mxu0
        %v740 = vld [vmem:[%s466 + $0x2] sm:$0xff]
        %v741 = vld [vmem:[%s466 + $0xa] sm:$0xff]
        %v742 = vld [vmem:[%s466 + $0x12] sm:$0xff]
        %v743 = vld [vmem:[%s466 + $0x1a] sm:$0xf]
        %s744 = scalar_lea.vmem %s1, 128
        %v745 = vld [vmem:[%s744] sm:$0xff]
        %v746 = vld [vmem:[%s744 + $0x8] sm:$0xff]
        %v747 = vld [vmem:[%s744 + $0x10] sm:$0xff]
        %v748 = vld [vmem:[%s744 + $0x18] sm:$0xff]
        %v749 = vld [vmem:[%s744 + $0x20] sm:$0xff]
        %v750 = vld [vmem:[%s744 + $0x28] sm:$0xff]
        %v751 = vld [vmem:[%s744 + $0x30] sm:$0xff]
        %v752 = vld [vmem:[%s744 + $0x38] sm:$0xff]
        %v754 = vsel %vm537, %v740, 0
        %v757 = vsel %vm537, %v741, 0
        %v760 = vsel %vm537, %v742, 0
        %v763 = vsel %vm537, %v743, 0
        %765 = vmatprep.subr.mxu0 %v746
        %766 = vmatpush1.msra.mxu0 %v745
        %767 = vmatprep.subr.mxu0 %v748
        %768 = vmatpush1.msra.mxu0 %v747
        %769 = vmatprep.subr.mxu0 %v750
        %770 = vmatpush1.msra.mxu0 %v749
        %771 = vmatprep.subr.mxu0 %v752
        %772 = vmatpush1.msra.mxu0 %v751
        %773 = vmatprep.subr.mxu0 0.0
        %774 = vmatpush1.msra.mxu0 0.0
        %775 = vmatprep.subr.mxu0 0.0
        %776 = vmatpush1.msra.mxu0 0.0
        %777 = vmatprep.subr.mxu0 0.0
        %778 = vmatpush1.msra.mxu0 0.0
        %779 = vmatprep.subr.mxu0 0.0
        %780 = vmatpush1.msra.mxu0 0.0
        %781 = vmatprep.subr.mxu0 0.0
        %782 = vmatpush1.msra.mxu0 0.0
        %783 = vmatprep.subr.mxu0 0.0
        %784 = vmatpush1.msra.mxu0 0.0
        %785 = vmatprep.subr.mxu0 0.0
        %786 = vmatpush1.msra.mxu0 0.0
        %787 = vmatprep.subr.mxu0 0.0
        %788 = vmatpush1.msra.mxu0 0.0
        %789 = vmatprep.subr.mxu0 0.0
        %790 = vmatpush1.msra.mxu0 0.0
        %791 = vmatprep.subr.mxu0 0.0
        %792 = vmatpush1.msra.mxu0 0.0
        %793 = vmatprep.subr.mxu0 0.0
        %794 = vmatpush1.msra.mxu0 0.0
        %795 = vmatprep.subr.mxu0 0.0
        %796 = vmatpush1.msra.mxu0 0.0
        %797 = vmatprep.subr.mxu0 0.0
        %798 = vmatpush1.msra.mxu0 0.0
        %799 = vmatprep.subr.mxu0 0.0
        %800 = vmatpush1.msra.mxu0 0.0
        %801 = vmatprep.subr.mxu0 0.0
        %802 = vmatpush1.msra.mxu0 0.0
        %803 = vmatprep.subr.mxu0 0.0
        %804 = vmatpush1.msra.mxu0 0.0
        %805 = vmatprep.subr.mxu0 0.0
        %806 = vmatpush1.msra.mxu0 0.0
        %807 = vmatprep.subr.mxu0 0.0
        %808 = vmatpush1.msra.mxu0 0.0
        %809 = vmatprep.subr.mxu0 0.0
        %810 = vmatpush1.msra.mxu0 0.0
        %811 = vmatprep.subr.mxu0 0.0
        %812 = vmatpush1.msra.mxu0 0.0
        %813 = vmatprep.subr.mxu0 0.0
        %814 = vmatpush1.msra.mxu0 0.0
        %815 = vmatprep.subr.mxu0 0.0
        %816 = vmatpush1.msra.mxu0 0.0
        %817 = vmatprep.subr.mxu0 0.0
        %818 = vmatpush1.msra.mxu0 0.0
        %819 = vmatprep.subr.mxu0 0.0
        %820 = vmatpush1.msra.mxu0 0.0
        %821 = vmatprep.subr.mxu0 0.0
        %822 = vmatpush1.msra.mxu0 0.0
        %823 = vmatprep.subr.mxu0 0.0
        %824 = vmatpush1.msra.mxu0 0.0
        %825 = vmatprep.subr.mxu0 0.0
        %826 = vmatpush1.msra.mxu0 0.0
        %827 = vmatprep.subr.mxu0 0.0
        %828 = vmatpush1.msra.mxu0 0.0
        %829 = vmatprep.mubr.f32.mxu0 0.0
        %830 = vmatmul.mubr.f32.gmra.mrb[0].mxu0 %v754
        %v831 = vpop.f32.mrb[0].mxu0
        %v832 = vadd.f32 0.0, %v831
        %v833 = vpop.f32.mrb[0].mxu0
        %v834 = vadd.f32 0.0, %v833
        %835 = vmatprep.mubr.f32.mxu0 0.0
        %836 = vmatmul.mubr.f32.gmra.mrb[0].mxu0 %v757
        %v837 = vpop.f32.mrb[0].mxu0
        %v838 = vadd.f32 0.0, %v837
        %v839 = vpop.f32.mrb[0].mxu0
        %v840 = vadd.f32 0.0, %v839
        %841 = vmatprep.mubr.f32.mxu0 0.0
        %842 = vmatmul.mubr.f32.gmra.mrb[0].mxu0 %v760
        %v843 = vpop.f32.mrb[0].mxu0
        %v844 = vadd.f32 0.0, %v843
        %v845 = vpop.f32.mrb[0].mxu0
        %v846 = vadd.f32 0.0, %v845
        %847 = vmatprep.mubr.f32.mxu0 0.0
        %848 = vmatmul.mubr.f32.gmra.mrb[0].mxu0 %v763
        %v849 = vpop.f32.mrb[0].mxu0
        %v850 = vadd.f32 0.0, %v849
        %v851 = vpop.f32.mrb[0].mxu0
        %v852 = vadd.f32 0.0, %v851
        %853 = vdwg.mxu0
        %v854 = vadd.f32 %v718, %v832
        %v855 = vadd.f32 %v720, %v834
        %v856 = vadd.f32 %v724, %v838
        %v857 = vadd.f32 %v726, %v840
        %v858 = vadd.f32 %v730, %v844
        %v859 = vadd.f32 %v732, %v846
        %v860 = vadd.f32 %v736, %v850
        %v861 = vadd.f32 %v738, %v852
        %v862 = vld [vmem:[%s466 + $0x3] sm:$0xff]
        %v863 = vld [vmem:[%s466 + $0xb] sm:$0xff]
        %v864 = vld [vmem:[%s466 + $0x13] sm:$0xff]
        %v865 = vld [vmem:[%s466 + $0x1b] sm:$0xf]
        %s866 = scalar_lea.vmem %s1, 192
        %v867 = vld [vmem:[%s866] sm:$0xff]
        %v868 = vld [vmem:[%s866 + $0x8] sm:$0xff]
        %v869 = vld [vmem:[%s866 + $0x10] sm:$0xff]
        %v870 = vld [vmem:[%s866 + $0x18] sm:$0xff]
        %v871 = vld [vmem:[%s866 + $0x20] sm:$0xff]
        %v872 = vld [vmem:[%s866 + $0x28] sm:$0xff]
        %v873 = vld [vmem:[%s866 + $0x30] sm:$0xff]
        %v874 = vld [vmem:[%s866 + $0x38] sm:$0xff]
        %v876 = vsel %vm537, %v862, 0
        %v879 = vsel %vm537, %v863, 0
        %v882 = vsel %vm537, %v864, 0
        %v885 = vsel %vm537, %v865, 0
        %887 = vmatprep.subr.mxu0 %v868
        %888 = vmatpush1.msra.mxu0 %v867
        %889 = vmatprep.subr.mxu0 %v870
        %890 = vmatpush1.msra.mxu0 %v869
        %891 = vmatprep.subr.mxu0 %v872
        %892 = vmatpush1.msra.mxu0 %v871
        %893 = vmatprep.subr.mxu0 %v874
        %894 = vmatpush1.msra.mxu0 %v873
        %895 = vmatprep.subr.mxu0 0.0
        %896 = vmatpush1.msra.mxu0 0.0
        %897 = vmatprep.subr.mxu0 0.0
        %898 = vmatpush1.msra.mxu0 0.0
        %899 = vmatprep.subr.mxu0 0.0
        %900 = vmatpush1.msra.mxu0 0.0
        %901 = vmatprep.subr.mxu0 0.0
        %902 = vmatpush1.msra.mxu0 0.0
        %903 = vmatprep.subr.mxu0 0.0
        %904 = vmatpush1.msra.mxu0 0.0
        %905 = vmatprep.subr.mxu0 0.0
        %906 = vmatpush1.msra.mxu0 0.0
        %907 = vmatprep.subr.mxu0 0.0
        %908 = vmatpush1.msra.mxu0 0.0
        %909 = vmatprep.subr.mxu0 0.0
        %910 = vmatpush1.msra.mxu0 0.0
        %911 = vmatprep.subr.mxu0 0.0
        %912 = vmatpush1.msra.mxu0 0.0
        %913 = vmatprep.subr.mxu0 0.0
        %914 = vmatpush1.msra.mxu0 0.0
        %915 = vmatprep.subr.mxu0 0.0
        %916 = vmatpush1.msra.mxu0 0.0
        %917 = vmatprep.subr.mxu0 0.0
        %918 = vmatpush1.msra.mxu0 0.0
        %919 = vmatprep.subr.mxu0 0.0
        %920 = vmatpush1.msra.mxu0 0.0
        %921 = vmatprep.subr.mxu0 0.0
        %922 = vmatpush1.msra.mxu0 0.0
        %923 = vmatprep.subr.mxu0 0.0
        %924 = vmatpush1.msra.mxu0 0.0
        %925 = vmatprep.subr.mxu0 0.0
        %926 = vmatpush1.msra.mxu0 0.0
        %927 = vmatprep.subr.mxu0 0.0
        %928 = vmatpush1.msra.mxu0 0.0
        %929 = vmatprep.subr.mxu0 0.0
        %930 = vmatpush1.msra.mxu0 0.0
        %931 = vmatprep.subr.mxu0 0.0
        %932 = vmatpush1.msra.mxu0 0.0
        %933 = vmatprep.subr.mxu0 0.0
        %934 = vmatpush1.msra.mxu0 0.0
        %935 = vmatprep.subr.mxu0 0.0
        %936 = vmatpush1.msra.mxu0 0.0
        %937 = vmatprep.subr.mxu0 0.0
        %938 = vmatpush1.msra.mxu0 0.0
        %939 = vmatprep.subr.mxu0 0.0
        %940 = vmatpush1.msra.mxu0 0.0
        %941 = vmatprep.subr.mxu0 0.0
        %942 = vmatpush1.msra.mxu0 0.0
        %943 = vmatprep.subr.mxu0 0.0
        %944 = vmatpush1.msra.mxu0 0.0
        %945 = vmatprep.subr.mxu0 0.0
        %946 = vmatpush1.msra.mxu0 0.0
        %947 = vmatprep.subr.mxu0 0.0
        %948 = vmatpush1.msra.mxu0 0.0
        %949 = vmatprep.subr.mxu0 0.0
        %950 = vmatpush1.msra.mxu0 0.0
        %951 = vmatprep.mubr.f32.mxu0 0.0
        %952 = vmatmul.mubr.f32.gmra.mrb[0].mxu0 %v876
        %v953 = vpop.f32.mrb[0].mxu0
        %v954 = vadd.f32 0.0, %v953
        %v955 = vpop.f32.mrb[0].mxu0
        %v956 = vadd.f32 0.0, %v955
        %957 = vmatprep.mubr.f32.mxu0 0.0
        %958 = vmatmul.mubr.f32.gmra.mrb[0].mxu0 %v879
        %v959 = vpop.f32.mrb[0].mxu0
        %v960 = vadd.f32 0.0, %v959
        %v961 = vpop.f32.mrb[0].mxu0
        %v962 = vadd.f32 0.0, %v961
        %963 = vmatprep.mubr.f32.mxu0 0.0
        %964 = vmatmul.mubr.f32.gmra.mrb[0].mxu0 %v882
        %v965 = vpop.f32.mrb[0].mxu0
        %v966 = vadd.f32 0.0, %v965
        %v967 = vpop.f32.mrb[0].mxu0
        %v968 = vadd.f32 0.0, %v967
        %969 = vmatprep.mubr.f32.mxu0 0.0
        %970 = vmatmul.mubr.f32.gmra.mrb[0].mxu0 %v885
        %v971 = vpop.f32.mrb[0].mxu0
        %v972 = vadd.f32 0.0, %v971
        %v973 = vpop.f32.mrb[0].mxu0
        %v974 = vadd.f32 0.0, %v973
        %975 = vdwg.mxu0
        %v976 = vadd.f32 %v854, %v954
        %v977 = vadd.f32 %v855, %v956
        %v978 = vadd.f32 %v856, %v960
        %v979 = vadd.f32 %v857, %v962
        %v980 = vadd.f32 %v858, %v966
        %v981 = vadd.f32 %v859, %v968
        %v982 = vadd.f32 %v860, %v972
        %v983 = vadd.f32 %v861, %v974
        %v984 = vld [vmem:[%s466 + $0x4] sm:$0xff]
        %v985 = vld [vmem:[%s466 + $0xc] sm:$0xff]
        %v986 = vld [vmem:[%s466 + $0x14] sm:$0xff]
        %v987 = vld [vmem:[%s466 + $0x1c] sm:$0xf]
        %s988 = scalar_lea.vmem %s1, 256
        %v989 = vld [vmem:[%s988] sm:$0xff]
        %v990 = vld [vmem:[%s988 + $0x8] sm:$0xff]
        %v991 = vld [vmem:[%s988 + $0x10] sm:$0xff]
        %v992 = vld [vmem:[%s988 + $0x18] sm:$0xff]
        %v993 = vld [vmem:[%s988 + $0x20] sm:$0xff]
        %v994 = vld [vmem:[%s988 + $0x28] sm:$0xff]
        %v995 = vld [vmem:[%s988 + $0x30] sm:$0xff]
        %v996 = vld [vmem:[%s988 + $0x38] sm:$0xff]
        %v998 = vsel %vm537, %v984, 0
        %v1001 = vsel %vm537, %v985, 0
        %v1004 = vsel %vm537, %v986, 0
        %v1007 = vsel %vm537, %v987, 0
        %1009 = vmatprep.subr.mxu0 %v990
        %1010 = vmatpush1.msra.mxu0 %v989
        %1011 = vmatprep.subr.mxu0 %v992
        %1012 = vmatpush1.msra.mxu0 %v991
        %1013 = vmatprep.subr.mxu0 %v994
        %1014 = vmatpush1.msra.mxu0 %v993
        %1015 = vmatprep.subr.mxu0 %v996
        %1016 = vmatpush1.msra.mxu0 %v995
        %1017 = vmatprep.subr.mxu0 0.0
        %1018 = vmatpush1.msra.mxu0 0.0
        %1019 = vmatprep.subr.mxu0 0.0
        %1020 = vmatpush1.msra.mxu0 0.0
        %1021 = vmatprep.subr.mxu0 0.0
        %1022 = vmatpush1.msra.mxu0 0.0
        %1023 = vmatprep.subr.mxu0 0.0
        %1024 = vmatpush1.msra.mxu0 0.0
        %1025 = vmatprep.subr.mxu0 0.0
        %1026 = vmatpush1.msra.mxu0 0.0
        %1027 = vmatprep.subr.mxu0 0.0
        %1028 = vmatpush1.msra.mxu0 0.0
        %1029 = vmatprep.subr.mxu0 0.0
        %1030 = vmatpush1.msra.mxu0 0.0
        %1031 = vmatprep.subr.mxu0 0.0
        %1032 = vmatpush1.msra.mxu0 0.0
        %1033 = vmatprep.subr.mxu0 0.0
        %1034 = vmatpush1.msra.mxu0 0.0
        %1035 = vmatprep.subr.mxu0 0.0
        %1036 = vmatpush1.msra.mxu0 0.0
        %1037 = vmatprep.subr.mxu0 0.0
        %1038 = vmatpush1.msra.mxu0 0.0
        %1039 = vmatprep.subr.mxu0 0.0
        %1040 = vmatpush1.msra.mxu0 0.0
        %1041 = vmatprep.subr.mxu0 0.0
        %1042 = vmatpush1.msra.mxu0 0.0
        %1043 = vmatprep.subr.mxu0 0.0
        %1044 = vmatpush1.msra.mxu0 0.0
        %1045 = vmatprep.subr.mxu0 0.0
        %1046 = vmatpush1.msra.mxu0 0.0
        %1047 = vmatprep.subr.mxu0 0.0
        %1048 = vmatpush1.msra.mxu0 0.0
        %1049 = vmatprep.subr.mxu0 0.0
        %1050 = vmatpush1.msra.mxu0 0.0
        %1051 = vmatprep.subr.mxu0 0.0
        %1052 = vmatpush1.msra.mxu0 0.0
        %1053 = vmatprep.subr.mxu0 0.0
        %1054 = vmatpush1.msra.mxu0 0.0
        %1055 = vmatprep.subr.mxu0 0.0
        %1056 = vmatpush1.msra.mxu0 0.0
        %1057 = vmatprep.subr.mxu0 0.0
        %1058 = vmatpush1.msra.mxu0 0.0
        %1059 = vmatprep.subr.mxu0 0.0
        %1060 = vmatpush1.msra.mxu0 0.0
        %1061 = vmatprep.subr.mxu0 0.0
        %1062 = vmatpush1.msra.mxu0 0.0
        %1063 = vmatprep.subr.mxu0 0.0
        %1064 = vmatpush1.msra.mxu0 0.0
        %1065 = vmatprep.subr.mxu0 0.0
        %1066 = vmatpush1.msra.mxu0 0.0
        %1067 = vmatprep.subr.mxu0 0.0
        %1068 = vmatpush1.msra.mxu0 0.0
        %1069 = vmatprep.subr.mxu0 0.0
        %1070 = vmatpush1.msra.mxu0 0.0
        %1071 = vmatprep.subr.mxu0 0.0
        %1072 = vmatpush1.msra.mxu0 0.0
        %1073 = vmatprep.mubr.f32.mxu0 0.0
        %1074 = vmatmul.mubr.f32.gmra.mrb[0].mxu0 %v998
        %v1075 = vpop.f32.mrb[0].mxu0
        %v1076 = vadd.f32 0.0, %v1075
        %v1077 = vpop.f32.mrb[0].mxu0
        %v1078 = vadd.f32 0.0, %v1077
        %1079 = vmatprep.mubr.f32.mxu0 0.0
        %1080 = vmatmul.mubr.f32.gmra.mrb[0].mxu0 %v1001
        %v1081 = vpop.f32.mrb[0].mxu0
        %v1082 = vadd.f32 0.0, %v1081
        %v1083 = vpop.f32.mrb[0].mxu0
        %v1084 = vadd.f32 0.0, %v1083
        %1085 = vmatprep.mubr.f32.mxu0 0.0
        %1086 = vmatmul.mubr.f32.gmra.mrb[0].mxu0 %v1004
        %v1087 = vpop.f32.mrb[0].mxu0
        %v1088 = vadd.f32 0.0, %v1087
        %v1089 = vpop.f32.mrb[0].mxu0
        %v1090 = vadd.f32 0.0, %v1089
        %1091 = vmatprep.mubr.f32.mxu0 0.0
        %1092 = vmatmul.mubr.f32.gmra.mrb[0].mxu0 %v1007
        %v1093 = vpop.f32.mrb[0].mxu0
        %v1094 = vadd.f32 0.0, %v1093
        %v1095 = vpop.f32.mrb[0].mxu0
        %v1096 = vadd.f32 0.0, %v1095
        %1097 = vdwg.mxu0
        %v1098 = vadd.f32 %v976, %v1076
        %v1099 = vadd.f32 %v977, %v1078
        %v1100 = vadd.f32 %v978, %v1082
        %v1101 = vadd.f32 %v979, %v1084
        %v1102 = vadd.f32 %v980, %v1088
        %v1103 = vadd.f32 %v981, %v1090
        %v1104 = vadd.f32 %v982, %v1094
        %v1105 = vadd.f32 %v983, %v1096
        %v1106 = vld [vmem:[%s2] sm:$0x3]
        %v1108 = vlaneseq
        %v1109 = vshrl.u32 %v1108, 7
        %v1110 = vsub.s32 0, %v1109
        %v1111 = vrot.slane %v1106, %v1110
        %v1112 = vlaneseq
        %v1113 = vshrl.u32 %v1112, 7
        %v1114 = vsub.s32 1, %v1113
        %v1115 = vrot.slane %v1106, %v1114
        %v1118 = vadd.f32 %v1098, %v1111
        %v1119 = vadd.f32 %v1099, %v1115
        %v1120 = vadd.f32 %v1100, %v1111
        %v1121 = vadd.f32 %v1101, %v1115
        %v1122 = vadd.f32 %v1102, %v1111
        %v1123 = vadd.f32 %v1103, %v1115
        %v1124 = vadd.f32 %v1104, %v1111
        %v1125 = vadd.f32 %v1105, %v1115
        %v1126 = vmax.f32 %v1118, 0.0
        %v1127 = vmax.f32 %v1119, 0.0
        %v1128 = vmax.f32 %v1120, 0.0
        %v1129 = vmax.f32 %v1121, 0.0
        %v1130 = vmax.f32 %v1122, 0.0
        %v1131 = vmax.f32 %v1123, 0.0
        %v1132 = vmax.f32 %v1124, 0.0
        %v1133 = vmax.f32 %v1125, 0.0
        %v1134 = vld [vmem:[%s3] sm:$0xff]
        %v1135 = vld [vmem:[%s3 + $0x8] sm:$0x3f]
        %vm1136 = vcmask 228352
        %v1138 = vsel %vm1136, %v1134, 0
        %v1141 = vsel %vm1136, %v1135, 0
        %vm1143 = vcmask 1043456
        %v1145 = vsel %vm1143, %v1132, 0
        %v1148 = vsel %vm1143, %v1133, 0
        %1150 = vmatprep.subr.mxu0 %v1127
        %1151 = vmatpush1.msra.mxu0 %v1126
        %1152 = vmatprep.subr.mxu0 %v1129
        %1153 = vmatpush1.msra.mxu0 %v1128
        %1154 = vmatprep.subr.mxu0 %v1131
        %1155 = vmatpush1.msra.mxu0 %v1130
        %1156 = vmatprep.subr.mxu0 %v1148
        %1157 = vmatpush1.msra.mxu0 %v1145
        %1158 = vmatprep.subr.mxu0 0.0
        %1159 = vmatpush1.msra.mxu0 0.0
        %1160 = vmatprep.subr.mxu0 0.0
        %1161 = vmatpush1.msra.mxu0 0.0
        %1162 = vmatprep.subr.mxu0 0.0
        %1163 = vmatpush1.msra.mxu0 0.0
        %1164 = vmatprep.subr.mxu0 0.0
        %1165 = vmatpush1.msra.mxu0 0.0
        %1166 = vmatprep.subr.mxu0 0.0
        %1167 = vmatpush1.msra.mxu0 0.0
        %1168 = vmatprep.subr.mxu0 0.0
        %1169 = vmatpush1.msra.mxu0 0.0
        %1170 = vmatprep.subr.mxu0 0.0
        %1171 = vmatpush1.msra.mxu0 0.0
        %1172 = vmatprep.subr.mxu0 0.0
        %1173 = vmatpush1.msra.mxu0 0.0
        %1174 = vmatprep.subr.mxu0 0.0
        %1175 = vmatpush1.msra.mxu0 0.0
        %1176 = vmatprep.subr.mxu0 0.0
        %1177 = vmatpush1.msra.mxu0 0.0
        %1178 = vmatprep.subr.mxu0 0.0
        %1179 = vmatpush1.msra.mxu0 0.0
        %1180 = vmatprep.subr.mxu0 0.0
        %1181 = vmatpush1.msra.mxu0 0.0
        %1182 = vmatprep.subr.mxu0 0.0
        %1183 = vmatpush1.msra.mxu0 0.0
        %1184 = vmatprep.subr.mxu0 0.0
        %1185 = vmatpush1.msra.mxu0 0.0
        %1186 = vmatprep.subr.mxu0 0.0
        %1187 = vmatpush1.msra.mxu0 0.0
        %1188 = vmatprep.subr.mxu0 0.0
        %1189 = vmatpush1.msra.mxu0 0.0
        %1190 = vmatprep.subr.mxu0 0.0
        %1191 = vmatpush1.msra.mxu0 0.0
        %1192 = vmatprep.subr.mxu0 0.0
        %1193 = vmatpush1.msra.mxu0 0.0
        %1194 = vmatprep.subr.mxu0 0.0
        %1195 = vmatpush1.msra.mxu0 0.0
        %1196 = vmatprep.subr.mxu0 0.0
        %1197 = vmatpush1.msra.mxu0 0.0
        %1198 = vmatprep.subr.mxu0 0.0
        %1199 = vmatpush1.msra.mxu0 0.0
        %1200 = vmatprep.subr.mxu0 0.0
        %1201 = vmatpush1.msra.mxu0 0.0
        %1202 = vmatprep.subr.mxu0 0.0
        %1203 = vmatpush1.msra.mxu0 0.0
        %1204 = vmatprep.subr.mxu0 0.0
        %1205 = vmatpush1.msra.mxu0 0.0
        %1206 = vmatprep.subr.mxu0 0.0
        %1207 = vmatpush1.msra.mxu0 0.0
        %1208 = vmatprep.subr.mxu0 0.0
        %1209 = vmatpush1.msra.mxu0 0.0
        %1210 = vmatprep.subr.mxu0 0.0
        %1211 = vmatpush1.msra.mxu0 0.0
        %1212 = vmatprep.subr.mxu0 0.0
        %1213 = vmatpush1.msra.mxu0 0.0
        %1214 = vmatprep.mubr.f32.mxu0 0.0
        %1215 = vmatmul.mubr.f32.gmra.mrb[0].mxu0 %v1138
        %v1216 = vpop.f32.mrb[0].mxu0
        %v1217 = vadd.f32 0.0, %v1216
        %v1218 = vpop.f32.mrb[0].mxu0
        %v1219 = vadd.f32 0.0, %v1218
        %1220 = vmatprep.mubr.f32.mxu0 0.0
        %1221 = vmatmul.mubr.f32.gmra.mrb[0].mxu0 %v1141
        %v1222 = vpop.f32.mrb[0].mxu0
        %v1223 = vadd.f32 0.0, %v1222
        %v1224 = vpop.f32.mrb[0].mxu0
        %v1225 = vadd.f32 0.0, %v1224
        %1226 = vdwg.mxu0
        %v1227 = vld [vmem:[%s4] sm:$0xff]
        %v1228 = vld [vmem:[%s4 + $0x8] sm:$0xff]
        %v1229 = vld [vmem:[%s4 + $0x10] sm:$0xff]
        %v1230 = vld [vmem:[%s4 + $0x18] sm:$0xff]
        %v1231 = vld [vmem:[%s4 + $0x20] sm:$0xff]
        %v1232 = vld [vmem:[%s4 + $0x28] sm:$0xff]
        %v1233 = vld [vmem:[%s4 + $0x30] sm:$0xff]
        %v1234 = vld [vmem:[%s4 + $0x38] sm:$0xff]
        %v1235 = vld [vmem:[%s4 + $0x40] sm:$0xff]
        %v1236 = vld [vmem:[%s4 + $0x48] sm:$0xff]
        %v1237 = vld [vmem:[%s4 + $0x50] sm:$0xff]
        %v1238 = vld [vmem:[%s4 + $0x58] sm:$0xff]
        %v1239 = vld [vmem:[%s4 + $0x60] sm:$0xff]
        %v1240 = vld [vmem:[%s4 + $0x68] sm:$0xff]
        %v1241 = vld [vmem:[%s4 + $0x70] sm:$0xff]
        %v1242 = vld [vmem:[%s4 + $0x78] sm:$0xff]
        %v1243 = vld [vmem:[%s4 + $0x80] sm:$0xff]
        %v1244 = vld [vmem:[%s4 + $0x88] sm:$0xff]
        %v1245 = vld [vmem:[%s4 + $0x90] sm:$0xff]
        %v1246 = vld [vmem:[%s4 + $0x98] sm:$0xff]
        %v1247 = vld [vmem:[%s4 + $0xa0] sm:$0xff]
        %vm1248 = vcmask 326656
        %v1250 = vsel %vm1248, %v1219, 0
        %v1253 = vsel %vm1248, %v1225, 0
        %1255 = vmatprep.subr.mxu0 0.0
        %1256 = vmatpush1.msra.mxu0 %v1227
        %1257 = vmatprep.subr.mxu0 0.0
        %1258 = vmatpush1.msra.mxu0 %v1228
        %1259 = vmatprep.subr.mxu0 0.0
        %1260 = vmatpush1.msra.mxu0 %v1229
        %1261 = vmatprep.subr.mxu0 0.0
        %1262 = vmatpush1.msra.mxu0 %v1230
        %1263 = vmatprep.subr.mxu0 0.0
        %1264 = vmatpush1.msra.mxu0 %v1231
        %1265 = vmatprep.subr.mxu0 0.0
        %1266 = vmatpush1.msra.mxu0 %v1232
        %1267 = vmatprep.subr.mxu0 0.0
        %1268 = vmatpush1.msra.mxu0 %v1233
        %1269 = vmatprep.subr.mxu0 0.0
        %1270 = vmatpush1.msra.mxu0 %v1234
        %1271 = vmatprep.subr.mxu0 0.0
        %1272 = vmatpush1.msra.mxu0 %v1235
        %1273 = vmatprep.subr.mxu0 0.0
        %1274 = vmatpush1.msra.mxu0 %v1236
        %1275 = vmatprep.subr.mxu0 0.0
        %1276 = vmatpush1.msra.mxu0 %v1237
        %1277 = vmatprep.subr.mxu0 0.0
        %1278 = vmatpush1.msra.mxu0 %v1238
        %1279 = vmatprep.subr.mxu0 0.0
        %1280 = vmatpush1.msra.mxu0 %v1239
        %1281 = vmatprep.subr.mxu0 0.0
        %1282 = vmatpush1.msra.mxu0 %v1240
        %1283 = vmatprep.subr.mxu0 0.0
        %1284 = vmatpush1.msra.mxu0 %v1241
        %1285 = vmatprep.subr.mxu0 0.0
        %1286 = vmatpush1.msra.mxu0 %v1242
        %1287 = vmatprep.subr.mxu0 0.0
        %1288 = vmatpush1.msra.mxu0 %v1243
        %1289 = vmatprep.subr.mxu0 0.0
        %1290 = vmatpush1.msra.mxu0 %v1244
        %1291 = vmatprep.subr.mxu0 0.0
        %1292 = vmatpush1.msra.mxu0 %v1245
        %1293 = vmatprep.subr.mxu0 0.0
        %1294 = vmatpush1.msra.mxu0 %v1246
        %1295 = vmatprep.subr.mxu0 0.0
        %1296 = vmatpush1.msra.mxu0 %v1247
        %1297 = vmatprep.subr.mxu0 0.0
        %1298 = vmatpush1.msra.mxu0 0.0
        %1299 = vmatprep.subr.mxu0 0.0
        %1300 = vmatpush1.msra.mxu0 0.0
        %1301 = vmatprep.subr.mxu0 0.0
        %1302 = vmatpush1.msra.mxu0 0.0
        %1303 = vmatprep.subr.mxu0 0.0
        %1304 = vmatpush1.msra.mxu0 0.0
        %1305 = vmatprep.subr.mxu0 0.0
        %1306 = vmatpush1.msra.mxu0 0.0
        %1307 = vmatprep.subr.mxu0 0.0
        %1308 = vmatpush1.msra.mxu0 0.0
        %1309 = vmatprep.subr.mxu0 0.0
        %1310 = vmatpush1.msra.mxu0 0.0
        %1311 = vmatprep.subr.mxu0 0.0
        %1312 = vmatpush1.msra.mxu0 0.0
        %1313 = vmatprep.subr.mxu0 0.0
        %1314 = vmatpush1.msra.mxu0 0.0
        %1315 = vmatprep.subr.mxu0 0.0
        %1316 = vmatpush1.msra.mxu0 0.0
        %1317 = vmatprep.subr.mxu0 0.0
        %1318 = vmatpush1.msra.mxu0 0.0
        %1319 = vmatprep.mubr.f32.mxu0 %v1250
        %1320 = vmatmul.mubr.f32.gmra.mrb[0].mxu0 %v1217
        %v1321 = vpop.f32.mrb[0].mxu0
        %v1322 = vadd.f32 0.0, %v1321
        %v1323 = vpop.f32.mrb[0].mxu0
        %1324 = vmatprep.mubr.f32.mxu0 %v1253
        %1325 = vmatmul.mubr.f32.gmra.mrb[0].mxu0 %v1223
        %v1326 = vpop.f32.mrb[0].mxu0
        %v1327 = vadd.f32 0.0, %v1326
        %v1328 = vpop.f32.mrb[0].mxu0
        %1329 = vdwg.mxu0
        %vm1330 = vcmask 687104
        %1331 = vst.msk [vmem:[#allocation2] sm:$0xff] %vm1330, %v1322
        %vm1332 = vcmask 685056
        %1333 = vst.msk [vmem:[#allocation2 + $0x8] sm:$0x3f] %vm1332, %v1327
        %v1334 = vld [vmem:[#allocation2] sm:$0xff]
        %v1335 = vld [vmem:[#allocation2 + $0x8] sm:$0x3]
        %v1336 = vld [vmem:[%s5] sm:$0xff]
        %v1337 = vld [vmem:[%s5 + $0x8] sm:$0xff]
        %v1338 = vld [vmem:[%s5 + $0x10] sm:$0xff]
        %v1339 = vld [vmem:[%s5 + $0x18] sm:$0xff]
        %v1340 = vld [vmem:[%s5 + $0x20] sm:$0xff]
        %v1341 = vld [vmem:[%s5 + $0x28] sm:$0xff]
        %v1342 = vld [vmem:[%s5 + $0x30] sm:$0xff]
        %v1343 = vld [vmem:[%s5 + $0x38] sm:$0xff]
        %v1344 = vld [vmem:[%s5 + $0x40] sm:$0xff]
        %v1345 = vld [vmem:[%s5 + $0x48] sm:$0xff]
        %v1346 = vld [vmem:[%s5 + $0x50] sm:$0xf]
        %v1347 = vld [vmem:[#allocation2 + $0x1] sm:$0xff]
        %v1348 = vld [vmem:[#allocation2 + $0x9] sm:$0x3]
        %s1349 = scalar_lea.vmem %s5, 88
        %v1350 = vld [vmem:[%s1349] sm:$0xff]
        %v1351 = vld [vmem:[%s1349 + $0x8] sm:$0xff]
        %v1352 = vld [vmem:[%s1349 + $0x10] sm:$0xff]
        %v1353 = vld [vmem:[%s1349 + $0x18] sm:$0xff]
        %v1354 = vld [vmem:[%s1349 + $0x20] sm:$0xff]
        %v1355 = vld [vmem:[%s1349 + $0x28] sm:$0xff]
        %v1356 = vld [vmem:[%s1349 + $0x30] sm:$0xff]
        %v1357 = vld [vmem:[%s1349 + $0x38] sm:$0xff]
        %v1358 = vld [vmem:[%s1349 + $0x40] sm:$0xff]
        %v1359 = vld [vmem:[%s1349 + $0x48] sm:$0xff]
        %v1360 = vld [vmem:[%s1349 + $0x50] sm:$0xf]
        %v1362 = vsel %vm1330, %v1347, 0
        %v1365 = vsel %vm1330, %v1348, 0
        %v1368 = vsel %vm1143, %v1360, 0
        %1370 = vmatprep.subr.mxu0 0.0
        %1371 = vmatpush1.msra.mxu0 %v1350
        %1372 = vmatprep.subr.mxu0 0.0
        %1373 = vmatpush1.msra.mxu0 %v1351
        %1374 = vmatprep.subr.mxu0 0.0
        %1375 = vmatpush1.msra.mxu0 %v1352
        %1376 = vmatprep.subr.mxu0 0.0
        %1377 = vmatpush1.msra.mxu0 %v1353
        %1378 = vmatprep.subr.mxu0 0.0
        %1379 = vmatpush1.msra.mxu0 %v1354
        %1380 = vmatprep.subr.mxu0 0.0
        %1381 = vmatpush1.msra.mxu0 %v1355
        %1382 = vmatprep.subr.mxu0 0.0
        %1383 = vmatpush1.msra.mxu0 %v1356
        %1384 = vmatprep.subr.mxu0 0.0
        %1385 = vmatpush1.msra.mxu0 %v1357
        %1386 = vmatprep.subr.mxu0 0.0
        %1387 = vmatpush1.msra.mxu0 %v1358
        %1388 = vmatprep.subr.mxu0 0.0
        %1389 = vmatpush1.msra.mxu0 %v1359
        %1390 = vmatprep.subr.mxu0 0.0
        %1391 = vmatpush1.msra.mxu0 %v1368
        %1392 = vmatprep.subr.mxu0 0.0
        %1393 = vmatpush1.msra.mxu0 0.0
        %1394 = vmatprep.subr.mxu0 0.0
        %1395 = vmatpush1.msra.mxu0 0.0
        %1396 = vmatprep.subr.mxu0 0.0
        %1397 = vmatpush1.msra.mxu0 0.0
        %1398 = vmatprep.subr.mxu0 0.0
        %1399 = vmatpush1.msra.mxu0 0.0
        %1400 = vmatprep.subr.mxu0 0.0
        %1401 = vmatpush1.msra.mxu0 0.0
        %1402 = vmatprep.subr.mxu0 0.0
        %1403 = vmatpush1.msra.mxu0 0.0
        %1404 = vmatprep.subr.mxu0 0.0
        %1405 = vmatpush1.msra.mxu0 0.0
        %1406 = vmatprep.subr.mxu0 0.0
        %1407 = vmatpush1.msra.mxu0 0.0
        %1408 = vmatprep.subr.mxu0 0.0
        %1409 = vmatpush1.msra.mxu0 0.0
        %1410 = vmatprep.subr.mxu0 0.0
        %1411 = vmatpush1.msra.mxu0 0.0
        %1412 = vmatprep.subr.mxu0 0.0
        %1413 = vmatpush1.msra.mxu0 0.0
        %1414 = vmatprep.subr.mxu0 0.0
        %1415 = vmatpush1.msra.mxu0 0.0
        %1416 = vmatprep.subr.mxu0 0.0
        %1417 = vmatpush1.msra.mxu0 0.0
        %1418 = vmatprep.subr.mxu0 0.0
        %1419 = vmatpush1.msra.mxu0 0.0
        %1420 = vmatprep.subr.mxu0 0.0
        %1421 = vmatpush1.msra.mxu0 0.0
        %1422 = vmatprep.subr.mxu0 0.0
        %1423 = vmatpush1.msra.mxu0 0.0
        %1424 = vmatprep.subr.mxu0 0.0
        %1425 = vmatpush1.msra.mxu0 0.0
        %1426 = vmatprep.subr.mxu0 0.0
        %1427 = vmatpush1.msra.mxu0 0.0
        %1428 = vmatprep.subr.mxu0 0.0
        %1429 = vmatpush1.msra.mxu0 0.0
        %1430 = vmatprep.subr.mxu0 0.0
        %1431 = vmatpush1.msra.mxu0 0.0
        %1432 = vmatprep.subr.mxu0 0.0
        %1433 = vmatpush1.msra.mxu0 0.0
        %1434 = vmatprep.mubr.f32.mxu0 0.0
        %1435 = vmatmul.mubr.f32.gmra.mrb[0].mxu0 %v1362
        %v1436 = vpop.f32.mrb[0].mxu0
        %v1437 = vadd.f32 0.0, %v1436
        %v1438 = vpop.f32.mrb[0].mxu0
        %1439 = vmatprep.mubr.f32.mxu0 0.0
        %1440 = vmatmul.mubr.f32.gmra.mrb[0].mxu0 %v1365
        %v1441 = vpop.f32.mrb[0].mxu0
        %v1442 = vadd.f32 0.0, %v1441
        %v1443 = vpop.f32.mrb[0].mxu0
        %1444 = vdwg.mxu0
        %v1446 = vsel %vm1330, %v1334, 0
        %v1449 = vsel %vm1330, %v1335, 0
        %v1452 = vsel %vm1143, %v1346, 0
        %1454 = vmatprep.subr.mxu0 0.0
        %1455 = vmatpush1.msra.mxu0 %v1336
        %1456 = vmatprep.subr.mxu0 0.0
        %1457 = vmatpush1.msra.mxu0 %v1337
        %1458 = vmatprep.subr.mxu0 0.0
        %1459 = vmatpush1.msra.mxu0 %v1338
        %1460 = vmatprep.subr.mxu0 0.0
        %1461 = vmatpush1.msra.mxu0 %v1339
        %1462 = vmatprep.subr.mxu0 0.0
        %1463 = vmatpush1.msra.mxu0 %v1340
        %1464 = vmatprep.subr.mxu0 0.0
        %1465 = vmatpush1.msra.mxu0 %v1341
        %1466 = vmatprep.subr.mxu0 0.0
        %1467 = vmatpush1.msra.mxu0 %v1342
        %1468 = vmatprep.subr.mxu0 0.0
        %1469 = vmatpush1.msra.mxu0 %v1343
        %1470 = vmatprep.subr.mxu0 0.0
        %1471 = vmatpush1.msra.mxu0 %v1344
        %1472 = vmatprep.subr.mxu0 0.0
        %1473 = vmatpush1.msra.mxu0 %v1345
        %1474 = vmatprep.subr.mxu0 0.0
        %1475 = vmatpush1.msra.mxu0 %v1452
        %1476 = vmatprep.subr.mxu0 0.0
        %1477 = vmatpush1.msra.mxu0 0.0
        %1478 = vmatprep.subr.mxu0 0.0
        %1479 = vmatpush1.msra.mxu0 0.0
        %1480 = vmatprep.subr.mxu0 0.0
        %1481 = vmatpush1.msra.mxu0 0.0
        %1482 = vmatprep.subr.mxu0 0.0
        %1483 = vmatpush1.msra.mxu0 0.0
        %1484 = vmatprep.subr.mxu0 0.0
        %1485 = vmatpush1.msra.mxu0 0.0
        %1486 = vmatprep.subr.mxu0 0.0
        %1487 = vmatpush1.msra.mxu0 0.0
        %1488 = vmatprep.subr.mxu0 0.0
        %1489 = vmatpush1.msra.mxu0 0.0
        %1490 = vmatprep.subr.mxu0 0.0
        %1491 = vmatpush1.msra.mxu0 0.0
        %1492 = vmatprep.subr.mxu0 0.0
        %1493 = vmatpush1.msra.mxu0 0.0
        %1494 = vmatprep.subr.mxu0 0.0
        %1495 = vmatpush1.msra.mxu0 0.0
        %1496 = vmatprep.subr.mxu0 0.0
        %1497 = vmatpush1.msra.mxu0 0.0
        %1498 = vmatprep.subr.mxu0 0.0
        %1499 = vmatpush1.msra.mxu0 0.0
        %1500 = vmatprep.subr.mxu0 0.0
        %1501 = vmatpush1.msra.mxu0 0.0
        %1502 = vmatprep.subr.mxu0 0.0
        %1503 = vmatpush1.msra.mxu0 0.0
        %1504 = vmatprep.subr.mxu0 0.0
        %1505 = vmatpush1.msra.mxu0 0.0
        %1506 = vmatprep.subr.mxu0 0.0
        %1507 = vmatpush1.msra.mxu0 0.0
        %1508 = vmatprep.subr.mxu0 0.0
        %1509 = vmatpush1.msra.mxu0 0.0
        %1510 = vmatprep.subr.mxu0 0.0
        %1511 = vmatpush1.msra.mxu0 0.0
        %1512 = vmatprep.subr.mxu0 0.0
        %1513 = vmatpush1.msra.mxu0 0.0
        %1514 = vmatprep.subr.mxu0 0.0
        %1515 = vmatpush1.msra.mxu0 0.0
        %1516 = vmatprep.subr.mxu0 0.0
        %1517 = vmatpush1.msra.mxu0 0.0
        %1518 = vmatprep.mubr.f32.mxu0 0.0
        %1519 = vmatmul.mubr.f32.gmra.mrb[0].mxu0 %v1446
        %v1520 = vpop.f32.mrb[0].mxu0
        %v1521 = vadd.f32 %v1437, %v1520
        %v1522 = vpop.f32.mrb[0].mxu0
        %1523 = vmatprep.mubr.f32.mxu0 0.0
        %1524 = vmatmul.mubr.f32.gmra.mrb[0].mxu0 %v1449
        %v1525 = vpop.f32.mrb[0].mxu0
        %v1526 = vadd.f32 %v1442, %v1525
        %v1527 = vpop.f32.mrb[0].mxu0
        %1528 = vdwg.mxu0
        %v1529 = vld [vmem:[#allocation2 + $0x2] sm:$0xff]
        %v1530 = vld [vmem:[#allocation2 + $0xa] sm:$0x3]
        %s1531 = scalar_lea.vmem %s5, 176
        %v1532 = vld [vmem:[%s1531] sm:$0xff]
        %v1533 = vld [vmem:[%s1531 + $0x8] sm:$0xff]
        %v1534 = vld [vmem:[%s1531 + $0x10] sm:$0xff]
        %v1535 = vld [vmem:[%s1531 + $0x18] sm:$0xff]
        %v1536 = vld [vmem:[%s1531 + $0x20] sm:$0xff]
        %v1537 = vld [vmem:[%s1531 + $0x28] sm:$0xff]
        %v1538 = vld [vmem:[%s1531 + $0x30] sm:$0xff]
        %v1539 = vld [vmem:[%s1531 + $0x38] sm:$0xff]
        %v1540 = vld [vmem:[%s1531 + $0x40] sm:$0xff]
        %v1541 = vld [vmem:[%s1531 + $0x48] sm:$0xff]
        %v1542 = vld [vmem:[%s1531 + $0x50] sm:$0xf]
        %v1544 = vsel %vm1330, %v1529, 0
        %v1547 = vsel %vm1330, %v1530, 0
        %v1550 = vsel %vm1143, %v1542, 0
        %1552 = vmatprep.subr.mxu0 0.0
        %1553 = vmatpush1.msra.mxu0 %v1532
        %1554 = vmatprep.subr.mxu0 0.0
        %1555 = vmatpush1.msra.mxu0 %v1533
        %1556 = vmatprep.subr.mxu0 0.0
        %1557 = vmatpush1.msra.mxu0 %v1534
        %1558 = vmatprep.subr.mxu0 0.0
        %1559 = vmatpush1.msra.mxu0 %v1535
        %1560 = vmatprep.subr.mxu0 0.0
        %1561 = vmatpush1.msra.mxu0 %v1536
        %1562 = vmatprep.subr.mxu0 0.0
        %1563 = vmatpush1.msra.mxu0 %v1537
        %1564 = vmatprep.subr.mxu0 0.0
        %1565 = vmatpush1.msra.mxu0 %v1538
        %1566 = vmatprep.subr.mxu0 0.0
        %1567 = vmatpush1.msra.mxu0 %v1539
        %1568 = vmatprep.subr.mxu0 0.0
        %1569 = vmatpush1.msra.mxu0 %v1540
        %1570 = vmatprep.subr.mxu0 0.0
        %1571 = vmatpush1.msra.mxu0 %v1541
        %1572 = vmatprep.subr.mxu0 0.0
        %1573 = vmatpush1.msra.mxu0 %v1550
        %1574 = vmatprep.subr.mxu0 0.0
        %1575 = vmatpush1.msra.mxu0 0.0
        %1576 = vmatprep.subr.mxu0 0.0
        %1577 = vmatpush1.msra.mxu0 0.0
        %1578 = vmatprep.subr.mxu0 0.0
        %1579 = vmatpush1.msra.mxu0 0.0
        %1580 = vmatprep.subr.mxu0 0.0
        %1581 = vmatpush1.msra.mxu0 0.0
        %1582 = vmatprep.subr.mxu0 0.0
        %1583 = vmatpush1.msra.mxu0 0.0
        %1584 = vmatprep.subr.mxu0 0.0
        %1585 = vmatpush1.msra.mxu0 0.0
        %1586 = vmatprep.subr.mxu0 0.0
        %1587 = vmatpush1.msra.mxu0 0.0
        %1588 = vmatprep.subr.mxu0 0.0
        %1589 = vmatpush1.msra.mxu0 0.0
        %1590 = vmatprep.subr.mxu0 0.0
        %1591 = vmatpush1.msra.mxu0 0.0
        %1592 = vmatprep.subr.mxu0 0.0
        %1593 = vmatpush1.msra.mxu0 0.0
        %1594 = vmatprep.subr.mxu0 0.0
        %1595 = vmatpush1.msra.mxu0 0.0
        %1596 = vmatprep.subr.mxu0 0.0
        %1597 = vmatpush1.msra.mxu0 0.0
        %1598 = vmatprep.subr.mxu0 0.0
        %1599 = vmatpush1.msra.mxu0 0.0
        %1600 = vmatprep.subr.mxu0 0.0
        %1601 = vmatpush1.msra.mxu0 0.0
        %1602 = vmatprep.subr.mxu0 0.0
        %1603 = vmatpush1.msra.mxu0 0.0
        %1604 = vmatprep.subr.mxu0 0.0
        %1605 = vmatpush1.msra.mxu0 0.0
        %1606 = vmatprep.subr.mxu0 0.0
        %1607 = vmatpush1.msra.mxu0 0.0
        %1608 = vmatprep.subr.mxu0 0.0
        %1609 = vmatpush1.msra.mxu0 0.0
        %1610 = vmatprep.subr.mxu0 0.0
        %1611 = vmatpush1.msra.mxu0 0.0
        %1612 = vmatprep.subr.mxu0 0.0
        %1613 = vmatpush1.msra.mxu0 0.0
        %1614 = vmatprep.subr.mxu0 0.0
        %1615 = vmatpush1.msra.mxu0 0.0
        %1616 = vmatprep.mubr.f32.mxu0 0.0
        %1617 = vmatmul.mubr.f32.gmra.mrb[0].mxu0 %v1544
        %v1618 = vpop.f32.mrb[0].mxu0
        %v1619 = vadd.f32 0.0, %v1618
        %v1620 = vpop.f32.mrb[0].mxu0
        %1621 = vmatprep.mubr.f32.mxu0 0.0
        %1622 = vmatmul.mubr.f32.gmra.mrb[0].mxu0 %v1547
        %v1623 = vpop.f32.mrb[0].mxu0
        %v1624 = vadd.f32 0.0, %v1623
        %v1625 = vpop.f32.mrb[0].mxu0
        %1626 = vdwg.mxu0
        %v1627 = vadd.f32 %v1521, %v1619
        %v1628 = vadd.f32 %v1526, %v1624
        %v1629 = vld [vmem:[#allocation2 + $0x3] sm:$0xff]
        %v1630 = vld [vmem:[#allocation2 + $0xb] sm:$0x3]
        %s1631 = scalar_lea.vmem %s5, 264
        %v1632 = vld [vmem:[%s1631] sm:$0xff]
        %v1633 = vld [vmem:[%s1631 + $0x8] sm:$0xff]
        %v1634 = vld [vmem:[%s1631 + $0x10] sm:$0xff]
        %v1635 = vld [vmem:[%s1631 + $0x18] sm:$0xff]
        %v1636 = vld [vmem:[%s1631 + $0x20] sm:$0xff]
        %v1637 = vld [vmem:[%s1631 + $0x28] sm:$0xff]
        %v1638 = vld [vmem:[%s1631 + $0x30] sm:$0xff]
        %v1639 = vld [vmem:[%s1631 + $0x38] sm:$0xff]
        %v1640 = vld [vmem:[%s1631 + $0x40] sm:$0xff]
        %v1641 = vld [vmem:[%s1631 + $0x48] sm:$0xff]
        %v1642 = vld [vmem:[%s1631 + $0x50] sm:$0xf]
        %v1644 = vsel %vm1330, %v1629, 0
        %v1647 = vsel %vm1330, %v1630, 0
        %v1650 = vsel %vm1143, %v1642, 0
        %1652 = vmatprep.subr.mxu0 0.0
        %1653 = vmatpush1.msra.mxu0 %v1632
        %1654 = vmatprep.subr.mxu0 0.0
        %1655 = vmatpush1.msra.mxu0 %v1633
        %1656 = vmatprep.subr.mxu0 0.0
        %1657 = vmatpush1.msra.mxu0 %v1634
        %1658 = vmatprep.subr.mxu0 0.0
        %1659 = vmatpush1.msra.mxu0 %v1635
        %1660 = vmatprep.subr.mxu0 0.0
        %1661 = vmatpush1.msra.mxu0 %v1636
        %1662 = vmatprep.subr.mxu0 0.0
        %1663 = vmatpush1.msra.mxu0 %v1637
        %1664 = vmatprep.subr.mxu0 0.0
        %1665 = vmatpush1.msra.mxu0 %v1638
        %1666 = vmatprep.subr.mxu0 0.0
        %1667 = vmatpush1.msra.mxu0 %v1639
        %1668 = vmatprep.subr.mxu0 0.0
        %1669 = vmatpush1.msra.mxu0 %v1640
        %1670 = vmatprep.subr.mxu0 0.0
        %1671 = vmatpush1.msra.mxu0 %v1641
        %1672 = vmatprep.subr.mxu0 0.0
        %1673 = vmatpush1.msra.mxu0 %v1650
        %1674 = vmatprep.subr.mxu0 0.0
        %1675 = vmatpush1.msra.mxu0 0.0
        %1676 = vmatprep.subr.mxu0 0.0
        %1677 = vmatpush1.msra.mxu0 0.0
        %1678 = vmatprep.subr.mxu0 0.0
        %1679 = vmatpush1.msra.mxu0 0.0
        %1680 = vmatprep.subr.mxu0 0.0
        %1681 = vmatpush1.msra.mxu0 0.0
        %1682 = vmatprep.subr.mxu0 0.0
        %1683 = vmatpush1.msra.mxu0 0.0
        %1684 = vmatprep.subr.mxu0 0.0
        %1685 = vmatpush1.msra.mxu0 0.0
        %1686 = vmatprep.subr.mxu0 0.0
        %1687 = vmatpush1.msra.mxu0 0.0
        %1688 = vmatprep.subr.mxu0 0.0
        %1689 = vmatpush1.msra.mxu0 0.0
        %1690 = vmatprep.subr.mxu0 0.0
        %1691 = vmatpush1.msra.mxu0 0.0
        %1692 = vmatprep.subr.mxu0 0.0
        %1693 = vmatpush1.msra.mxu0 0.0
        %1694 = vmatprep.subr.mxu0 0.0
        %1695 = vmatpush1.msra.mxu0 0.0
        %1696 = vmatprep.subr.mxu0 0.0
        %1697 = vmatpush1.msra.mxu0 0.0
        %1698 = vmatprep.subr.mxu0 0.0
        %1699 = vmatpush1.msra.mxu0 0.0
        %1700 = vmatprep.subr.mxu0 0.0
        %1701 = vmatpush1.msra.mxu0 0.0
        %1702 = vmatprep.subr.mxu0 0.0
        %1703 = vmatpush1.msra.mxu0 0.0
        %1704 = vmatprep.subr.mxu0 0.0
        %1705 = vmatpush1.msra.mxu0 0.0
        %1706 = vmatprep.subr.mxu0 0.0
        %1707 = vmatpush1.msra.mxu0 0.0
        %1708 = vmatprep.subr.mxu0 0.0
        %1709 = vmatpush1.msra.mxu0 0.0
        %1710 = vmatprep.subr.mxu0 0.0
        %1711 = vmatpush1.msra.mxu0 0.0
        %1712 = vmatprep.subr.mxu0 0.0
        %1713 = vmatpush1.msra.mxu0 0.0
        %1714 = vmatprep.subr.mxu0 0.0
        %1715 = vmatpush1.msra.mxu0 0.0
        %1716 = vmatprep.mubr.f32.mxu0 0.0
        %1717 = vmatmul.mubr.f32.gmra.mrb[0].mxu0 %v1644
        %v1718 = vpop.f32.mrb[0].mxu0
        %v1719 = vadd.f32 0.0, %v1718
        %v1720 = vpop.f32.mrb[0].mxu0
        %1721 = vmatprep.mubr.f32.mxu0 0.0
        %1722 = vmatmul.mubr.f32.gmra.mrb[0].mxu0 %v1647
        %v1723 = vpop.f32.mrb[0].mxu0
        %v1724 = vadd.f32 0.0, %v1723
        %v1725 = vpop.f32.mrb[0].mxu0
        %1726 = vdwg.mxu0
        %v1727 = vadd.f32 %v1627, %v1719
        %v1728 = vadd.f32 %v1628, %v1724
        %v1729 = vld [vmem:[#allocation2 + $0x4] sm:$0xff]
        %v1730 = vld [vmem:[#allocation2 + $0xc] sm:$0x3]
        %s1731 = scalar_lea.vmem %s5, 352
        %v1732 = vld [vmem:[%s1731] sm:$0xff]
        %v1733 = vld [vmem:[%s1731 + $0x8] sm:$0xff]
        %v1734 = vld [vmem:[%s1731 + $0x10] sm:$0xff]
        %v1735 = vld [vmem:[%s1731 + $0x18] sm:$0xff]
        %v1736 = vld [vmem:[%s1731 + $0x20] sm:$0xff]
        %v1737 = vld [vmem:[%s1731 + $0x28] sm:$0xff]
        %v1738 = vld [vmem:[%s1731 + $0x30] sm:$0xff]
        %v1739 = vld [vmem:[%s1731 + $0x38] sm:$0xff]
        %v1740 = vld [vmem:[%s1731 + $0x40] sm:$0xff]
        %v1741 = vld [vmem:[%s1731 + $0x48] sm:$0xff]
        %v1742 = vld [vmem:[%s1731 + $0x50] sm:$0xf]
        %v1744 = vsel %vm1330, %v1729, 0
        %v1747 = vsel %vm1330, %v1730, 0
        %v1750 = vsel %vm1143, %v1742, 0
        %1752 = vmatprep.subr.mxu0 0.0
        %1753 = vmatpush1.msra.mxu0 %v1732
        %1754 = vmatprep.subr.mxu0 0.0
        %1755 = vmatpush1.msra.mxu0 %v1733
        %1756 = vmatprep.subr.mxu0 0.0
        %1757 = vmatpush1.msra.mxu0 %v1734
        %1758 = vmatprep.subr.mxu0 0.0
        %1759 = vmatpush1.msra.mxu0 %v1735
        %1760 = vmatprep.subr.mxu0 0.0
        %1761 = vmatpush1.msra.mxu0 %v1736
        %1762 = vmatprep.subr.mxu0 0.0
        %1763 = vmatpush1.msra.mxu0 %v1737
        %1764 = vmatprep.subr.mxu0 0.0
        %1765 = vmatpush1.msra.mxu0 %v1738
        %1766 = vmatprep.subr.mxu0 0.0
        %1767 = vmatpush1.msra.mxu0 %v1739
        %1768 = vmatprep.subr.mxu0 0.0
        %1769 = vmatpush1.msra.mxu0 %v1740
        %1770 = vmatprep.subr.mxu0 0.0
        %1771 = vmatpush1.msra.mxu0 %v1741
        %1772 = vmatprep.subr.mxu0 0.0
        %1773 = vmatpush1.msra.mxu0 %v1750
        %1774 = vmatprep.subr.mxu0 0.0
        %1775 = vmatpush1.msra.mxu0 0.0
        %1776 = vmatprep.subr.mxu0 0.0
        %1777 = vmatpush1.msra.mxu0 0.0
        %1778 = vmatprep.subr.mxu0 0.0
        %1779 = vmatpush1.msra.mxu0 0.0
        %1780 = vmatprep.subr.mxu0 0.0
        %1781 = vmatpush1.msra.mxu0 0.0
        %1782 = vmatprep.subr.mxu0 0.0
        %1783 = vmatpush1.msra.mxu0 0.0
        %1784 = vmatprep.subr.mxu0 0.0
        %1785 = vmatpush1.msra.mxu0 0.0
        %1786 = vmatprep.subr.mxu0 0.0
        %1787 = vmatpush1.msra.mxu0 0.0
        %1788 = vmatprep.subr.mxu0 0.0
        %1789 = vmatpush1.msra.mxu0 0.0
        %1790 = vmatprep.subr.mxu0 0.0
        %1791 = vmatpush1.msra.mxu0 0.0
        %1792 = vmatprep.subr.mxu0 0.0
        %1793 = vmatpush1.msra.mxu0 0.0
        %1794 = vmatprep.subr.mxu0 0.0
        %1795 = vmatpush1.msra.mxu0 0.0
        %1796 = vmatprep.subr.mxu0 0.0
        %1797 = vmatpush1.msra.mxu0 0.0
        %1798 = vmatprep.subr.mxu0 0.0
        %1799 = vmatpush1.msra.mxu0 0.0
        %1800 = vmatprep.subr.mxu0 0.0
        %1801 = vmatpush1.msra.mxu0 0.0
        %1802 = vmatprep.subr.mxu0 0.0
        %1803 = vmatpush1.msra.mxu0 0.0
        %1804 = vmatprep.subr.mxu0 0.0
        %1805 = vmatpush1.msra.mxu0 0.0
        %1806 = vmatprep.subr.mxu0 0.0
        %1807 = vmatpush1.msra.mxu0 0.0
        %1808 = vmatprep.subr.mxu0 0.0
        %1809 = vmatpush1.msra.mxu0 0.0
        %1810 = vmatprep.subr.mxu0 0.0
        %1811 = vmatpush1.msra.mxu0 0.0
        %1812 = vmatprep.subr.mxu0 0.0
        %1813 = vmatpush1.msra.mxu0 0.0
        %1814 = vmatprep.subr.mxu0 0.0
        %1815 = vmatpush1.msra.mxu0 0.0
        %1816 = vmatprep.mubr.f32.mxu0 0.0
        %1817 = vmatmul.mubr.f32.gmra.mrb[0].mxu0 %v1744
        %v1818 = vpop.f32.mrb[0].mxu0
        %v1819 = vadd.f32 0.0, %v1818
        %v1820 = vpop.f32.mrb[0].mxu0
        %1821 = vmatprep.mubr.f32.mxu0 0.0
        %1822 = vmatmul.mubr.f32.gmra.mrb[0].mxu0 %v1747
        %v1823 = vpop.f32.mrb[0].mxu0
        %v1824 = vadd.f32 0.0, %v1823
        %v1825 = vpop.f32.mrb[0].mxu0
        %1826 = vdwg.mxu0
        %v1827 = vadd.f32 %v1727, %v1819
        %v1828 = vadd.f32 %v1728, %v1824
        %v1829 = vld [vmem:[%s6] sm:$0x1]
        %v1831 = vlaneseq
        %v1832 = vshrl.u32 %v1831, 7
        %v1833 = vsub.s32 0, %v1832
        %v1834 = vrot.slane %v1829, %v1833
        %v1836 = vadd.f32 %v1827, %v1834
        %v1837 = vadd.f32 %v1828, %v1834
        %v1838 = vmax.f32 %v1836, 0.0
        %v1839 = vmax.f32 %v1837, 0.0
        %v1840 = vld [vmem:[%s7] sm:$0x1f]
        %vm1841 = vcmask 80896
        %v1843 = vsel %vm1841, %v1840, 0
        %vm1845 = vcmask 1041408
        %v1847 = vsel %vm1845, %v1839, 0
        %1849 = vmatprep.subr.mxu0 0.0
        %1850 = vmatpush1.msra.mxu0 %v1838
        %1851 = vmatprep.subr.mxu0 0.0
        %1852 = vmatpush1.msra.mxu0 %v1847
        %1853 = vmatprep.subr.mxu0 0.0
        %1854 = vmatpush1.msra.mxu0 0.0
        %1855 = vmatprep.subr.mxu0 0.0
        %1856 = vmatpush1.msra.mxu0 0.0
        %1857 = vmatprep.subr.mxu0 0.0
        %1858 = vmatpush1.msra.mxu0 0.0
        %1859 = vmatprep.subr.mxu0 0.0
        %1860 = vmatpush1.msra.mxu0 0.0
        %1861 = vmatprep.subr.mxu0 0.0
        %1862 = vmatpush1.msra.mxu0 0.0
        %1863 = vmatprep.subr.mxu0 0.0
        %1864 = vmatpush1.msra.mxu0 0.0
        %1865 = vmatprep.subr.mxu0 0.0
        %1866 = vmatpush1.msra.mxu0 0.0
        %1867 = vmatprep.subr.mxu0 0.0
        %1868 = vmatpush1.msra.mxu0 0.0
        %1869 = vmatprep.subr.mxu0 0.0
        %1870 = vmatpush1.msra.mxu0 0.0
        %1871 = vmatprep.subr.mxu0 0.0
        %1872 = vmatpush1.msra.mxu0 0.0
        %1873 = vmatprep.subr.mxu0 0.0
        %1874 = vmatpush1.msra.mxu0 0.0
        %1875 = vmatprep.subr.mxu0 0.0
        %1876 = vmatpush1.msra.mxu0 0.0
        %1877 = vmatprep.subr.mxu0 0.0
        %1878 = vmatpush1.msra.mxu0 0.0
        %1879 = vmatprep.subr.mxu0 0.0
        %1880 = vmatpush1.msra.mxu0 0.0
        %1881 = vmatprep.subr.mxu0 0.0
        %1882 = vmatpush1.msra.mxu0 0.0
        %1883 = vmatprep.subr.mxu0 0.0
        %1884 = vmatpush1.msra.mxu0 0.0
        %1885 = vmatprep.subr.mxu0 0.0
        %1886 = vmatpush1.msra.mxu0 0.0
        %1887 = vmatprep.subr.mxu0 0.0
        %1888 = vmatpush1.msra.mxu0 0.0
        %1889 = vmatprep.subr.mxu0 0.0
        %1890 = vmatpush1.msra.mxu0 0.0
        %1891 = vmatprep.subr.mxu0 0.0
        %1892 = vmatpush1.msra.mxu0 0.0
        %1893 = vmatprep.subr.mxu0 0.0
        %1894 = vmatpush1.msra.mxu0 0.0
        %1895 = vmatprep.subr.mxu0 0.0
        %1896 = vmatpush1.msra.mxu0 0.0
        %1897 = vmatprep.subr.mxu0 0.0
        %1898 = vmatpush1.msra.mxu0 0.0
        %1899 = vmatprep.subr.mxu0 0.0
        %1900 = vmatpush1.msra.mxu0 0.0
        %1901 = vmatprep.subr.mxu0 0.0
        %1902 = vmatpush1.msra.mxu0 0.0
        %1903 = vmatprep.subr.mxu0 0.0
        %1904 = vmatpush1.msra.mxu0 0.0
        %1905 = vmatprep.subr.mxu0 0.0
        %1906 = vmatpush1.msra.mxu0 0.0
        %1907 = vmatprep.subr.mxu0 0.0
        %1908 = vmatpush1.msra.mxu0 0.0
        %1909 = vmatprep.subr.mxu0 0.0
        %1910 = vmatpush1.msra.mxu0 0.0
        %1911 = vmatprep.subr.mxu0 0.0
        %1912 = vmatpush1.msra.mxu0 0.0
        %1913 = vmatprep.mubr.f32.mxu0 0.0
        %1914 = vmatmul.mubr.f32.gmra.mrb[0].mxu0 %v1843
        %v1915 = vpop.f32.mrb[0].mxu0
        %v1916 = vadd.f32 0.0, %v1915
        %v1917 = vpop.f32.mrb[0].mxu0
        %1918 = vdwg.mxu0
        %v1919 = vld [vmem:[%s8] sm:$0xff]
        %v1920 = vld [vmem:[%s8 + $0x8] sm:$0xff]
        %v1921 = vld [vmem:[%s8 + $0x10] sm:$0xff]
        %v1922 = vld [vmem:[%s8 + $0x18] sm:$0xff]
        %v1923 = vld [vmem:[%s8 + $0x20] sm:$0xff]
        %v1924 = vld [vmem:[%s8 + $0x28] sm:$0xff]
        %v1925 = vld [vmem:[%s8 + $0x30] sm:$0xff]
        %v1926 = vld [vmem:[%s8 + $0x38] sm:$0xf]
        %vm1927 = vcmask 490496
        %v1929 = vsel %vm1927, %v1916, 0
        %v1932 = vsel %vm1143, %v1926, 0
        %1934 = vmatprep.subr.mxu0 0.0
        %1935 = vmatpush1.msra.mxu0 %v1919
        %1936 = vmatprep.subr.mxu0 0.0
        %1937 = vmatpush1.msra.mxu0 %v1920
        %1938 = vmatprep.subr.mxu0 0.0
        %1939 = vmatpush1.msra.mxu0 %v1921
        %1940 = vmatprep.subr.mxu0 0.0
        %1941 = vmatpush1.msra.mxu0 %v1922
        %1942 = vmatprep.subr.mxu0 0.0
        %1943 = vmatpush1.msra.mxu0 %v1923
        %1944 = vmatprep.subr.mxu0 0.0
        %1945 = vmatpush1.msra.mxu0 %v1924
        %1946 = vmatprep.subr.mxu0 0.0
        %1947 = vmatpush1.msra.mxu0 %v1925
        %1948 = vmatprep.subr.mxu0 0.0
        %1949 = vmatpush1.msra.mxu0 %v1932
        %1950 = vmatprep.subr.mxu0 0.0
        %1951 = vmatpush1.msra.mxu0 0.0
        %1952 = vmatprep.subr.mxu0 0.0
        %1953 = vmatpush1.msra.mxu0 0.0
        %1954 = vmatprep.subr.mxu0 0.0
        %1955 = vmatpush1.msra.mxu0 0.0
        %1956 = vmatprep.subr.mxu0 0.0
        %1957 = vmatpush1.msra.mxu0 0.0
        %1958 = vmatprep.subr.mxu0 0.0
        %1959 = vmatpush1.msra.mxu0 0.0
        %1960 = vmatprep.subr.mxu0 0.0
        %1961 = vmatpush1.msra.mxu0 0.0
        %1962 = vmatprep.subr.mxu0 0.0
        %1963 = vmatpush1.msra.mxu0 0.0
        %1964 = vmatprep.subr.mxu0 0.0
        %1965 = vmatpush1.msra.mxu0 0.0
        %1966 = vmatprep.subr.mxu0 0.0
        %1967 = vmatpush1.msra.mxu0 0.0
        %1968 = vmatprep.subr.mxu0 0.0
        %1969 = vmatpush1.msra.mxu0 0.0
        %1970 = vmatprep.subr.mxu0 0.0
        %1971 = vmatpush1.msra.mxu0 0.0
        %1972 = vmatprep.subr.mxu0 0.0
        %1973 = vmatpush1.msra.mxu0 0.0
        %1974 = vmatprep.subr.mxu0 0.0
        %1975 = vmatpush1.msra.mxu0 0.0
        %1976 = vmatprep.subr.mxu0 0.0
        %1977 = vmatpush1.msra.mxu0 0.0
        %1978 = vmatprep.subr.mxu0 0.0
        %1979 = vmatpush1.msra.mxu0 0.0
        %1980 = vmatprep.subr.mxu0 0.0
        %1981 = vmatpush1.msra.mxu0 0.0
        %1982 = vmatprep.subr.mxu0 0.0
        %1983 = vmatpush1.msra.mxu0 0.0
        %1984 = vmatprep.subr.mxu0 0.0
        %1985 = vmatpush1.msra.mxu0 0.0
        %1986 = vmatprep.subr.mxu0 0.0
        %1987 = vmatpush1.msra.mxu0 0.0
        %1988 = vmatprep.subr.mxu0 0.0
        %1989 = vmatpush1.msra.mxu0 0.0
        %1990 = vmatprep.subr.mxu0 0.0
        %1991 = vmatpush1.msra.mxu0 0.0
        %1992 = vmatprep.subr.mxu0 0.0
        %1993 = vmatpush1.msra.mxu0 0.0
        %1994 = vmatprep.subr.mxu0 0.0
        %1995 = vmatpush1.msra.mxu0 0.0
        %1996 = vmatprep.subr.mxu0 0.0
        %1997 = vmatpush1.msra.mxu0 0.0
        %1998 = vmatprep.mubr.f32.mxu0 0.0
        %1999 = vmatmul.mubr.f32.gmra.mrb[0].mxu0 %v1929
        %v2000 = vpop.f32.mrb[0].mxu0
        %v2001 = vadd.f32 0.0, %v2000
        %v2002 = vpop.f32.mrb[0].mxu0
        %2003 = vdwg.mxu0
        %vm2004 = vcmask 241664
        %2005 = vst.msk [vmem:[#allocation3] sm:$0x1f] %vm2004, %v2001
        %v2006 = vld [vmem:[#allocation3] sm:$0x1]
        %v2007 = vld [vmem:[%s9] sm:$0xff]
        %v2008 = vld [vmem:[%s9 + $0x8] sm:$0xff]
        %v2009 = vld [vmem:[%s9 + $0x10] sm:$0xff]
        %v2010 = vld [vmem:[%s9 + $0x18] sm:$0x3f]
        %v2011 = vld [vmem:[#allocation3 + $0x1] sm:$0x1]
        %s2012 = scalar_lea.vmem %s9, 32
        %v2013 = vld [vmem:[%s2012] sm:$0xff]
        %v2014 = vld [vmem:[%s2012 + $0x8] sm:$0xff]
        %v2015 = vld [vmem:[%s2012 + $0x10] sm:$0xff]
        %v2016 = vld [vmem:[%s2012 + $0x18] sm:$0x3f]
        %vm2017 = vcmask 244736
        %v2019 = vsel %vm2017, %v2011, 0
        %vm2021 = vcmask 1045504
        %v2023 = vsel %vm2021, %v2016, 0
        %2025 = vmatprep.subr.mxu0 0.0
        %2026 = vmatpush1.msra.mxu0 %v2013
        %2027 = vmatprep.subr.mxu0 0.0
        %2028 = vmatpush1.msra.mxu0 %v2014
        %2029 = vmatprep.subr.mxu0 0.0
        %2030 = vmatpush1.msra.mxu0 %v2015
        %2031 = vmatprep.subr.mxu0 0.0
        %2032 = vmatpush1.msra.mxu0 %v2023
        %2033 = vmatprep.subr.mxu0 0.0
        %2034 = vmatpush1.msra.mxu0 0.0
        %2035 = vmatprep.subr.mxu0 0.0
        %2036 = vmatpush1.msra.mxu0 0.0
        %2037 = vmatprep.subr.mxu0 0.0
        %2038 = vmatpush1.msra.mxu0 0.0
        %2039 = vmatprep.subr.mxu0 0.0
        %2040 = vmatpush1.msra.mxu0 0.0
        %2041 = vmatprep.subr.mxu0 0.0
        %2042 = vmatpush1.msra.mxu0 0.0
        %2043 = vmatprep.subr.mxu0 0.0
        %2044 = vmatpush1.msra.mxu0 0.0
        %2045 = vmatprep.subr.mxu0 0.0
        %2046 = vmatpush1.msra.mxu0 0.0
        %2047 = vmatprep.subr.mxu0 0.0
        %2048 = vmatpush1.msra.mxu0 0.0
        %2049 = vmatprep.subr.mxu0 0.0
        %2050 = vmatpush1.msra.mxu0 0.0
        %2051 = vmatprep.subr.mxu0 0.0
        %2052 = vmatpush1.msra.mxu0 0.0
        %2053 = vmatprep.subr.mxu0 0.0
        %2054 = vmatpush1.msra.mxu0 0.0
        %2055 = vmatprep.subr.mxu0 0.0
        %2056 = vmatpush1.msra.mxu0 0.0
        %2057 = vmatprep.subr.mxu0 0.0
        %2058 = vmatpush1.msra.mxu0 0.0
        %2059 = vmatprep.subr.mxu0 0.0
        %2060 = vmatpush1.msra.mxu0 0.0
        %2061 = vmatprep.subr.mxu0 0.0
        %2062 = vmatpush1.msra.mxu0 0.0
        %2063 = vmatprep.subr.mxu0 0.0
        %2064 = vmatpush1.msra.mxu0 0.0
        %2065 = vmatprep.subr.mxu0 0.0
        %2066 = vmatpush1.msra.mxu0 0.0
        %2067 = vmatprep.subr.mxu0 0.0
        %2068 = vmatpush1.msra.mxu0 0.0
        %2069 = vmatprep.subr.mxu0 0.0
        %2070 = vmatpush1.msra.mxu0 0.0
        %2071 = vmatprep.subr.mxu0 0.0
        %2072 = vmatpush1.msra.mxu0 0.0
        %2073 = vmatprep.subr.mxu0 0.0
        %2074 = vmatpush1.msra.mxu0 0.0
        %2075 = vmatprep.subr.mxu0 0.0
        %2076 = vmatpush1.msra.mxu0 0.0
        %2077 = vmatprep.subr.mxu0 0.0
        %2078 = vmatpush1.msra.mxu0 0.0
        %2079 = vmatprep.subr.mxu0 0.0
        %2080 = vmatpush1.msra.mxu0 0.0
        %2081 = vmatprep.subr.mxu0 0.0
        %2082 = vmatpush1.msra.mxu0 0.0
        %2083 = vmatprep.subr.mxu0 0.0
        %2084 = vmatpush1.msra.mxu0 0.0
        %2085 = vmatprep.subr.mxu0 0.0
        %2086 = vmatpush1.msra.mxu0 0.0
        %2087 = vmatprep.subr.mxu0 0.0
        %2088 = vmatpush1.msra.mxu0 0.0
        %2089 = vmatprep.mubr.f32.mxu0 0.0
        %2090 = vmatmul.mubr.f32.gmra.mrb[0].mxu0 %v2019
        %v2091 = vpop.f32.mrb[0].mxu0
        %v2092 = vadd.f32 0.0, %v2091
        %v2093 = vpop.f32.mrb[0].mxu0
        %2094 = vdwg.mxu0
        %v2096 = vsel %vm2017, %v2006, 0
        %v2099 = vsel %vm2021, %v2010, 0
        %2101 = vmatprep.subr.mxu0 0.0
        %2102 = vmatpush1.msra.mxu0 %v2007
        %2103 = vmatprep.subr.mxu0 0.0
        %2104 = vmatpush1.msra.mxu0 %v2008
        %2105 = vmatprep.subr.mxu0 0.0
        %2106 = vmatpush1.msra.mxu0 %v2009
        %2107 = vmatprep.subr.mxu0 0.0
        %2108 = vmatpush1.msra.mxu0 %v2099
        %2109 = vmatprep.subr.mxu0 0.0
        %2110 = vmatpush1.msra.mxu0 0.0
        %2111 = vmatprep.subr.mxu0 0.0
        %2112 = vmatpush1.msra.mxu0 0.0
        %2113 = vmatprep.subr.mxu0 0.0
        %2114 = vmatpush1.msra.mxu0 0.0
        %2115 = vmatprep.subr.mxu0 0.0
        %2116 = vmatpush1.msra.mxu0 0.0
        %2117 = vmatprep.subr.mxu0 0.0
        %2118 = vmatpush1.msra.mxu0 0.0
        %2119 = vmatprep.subr.mxu0 0.0
        %2120 = vmatpush1.msra.mxu0 0.0
        %2121 = vmatprep.subr.mxu0 0.0
        %2122 = vmatpush1.msra.mxu0 0.0
        %2123 = vmatprep.subr.mxu0 0.0
        %2124 = vmatpush1.msra.mxu0 0.0
        %2125 = vmatprep.subr.mxu0 0.0
        %2126 = vmatpush1.msra.mxu0 0.0
        %2127 = vmatprep.subr.mxu0 0.0
        %2128 = vmatpush1.msra.mxu0 0.0
        %2129 = vmatprep.subr.mxu0 0.0
        %2130 = vmatpush1.msra.mxu0 0.0
        %2131 = vmatprep.subr.mxu0 0.0
        %2132 = vmatpush1.msra.mxu0 0.0
        %2133 = vmatprep.subr.mxu0 0.0
        %2134 = vmatpush1.msra.mxu0 0.0
        %2135 = vmatprep.subr.mxu0 0.0
        %2136 = vmatpush1.msra.mxu0 0.0
        %2137 = vmatprep.subr.mxu0 0.0
        %2138 = vmatpush1.msra.mxu0 0.0
        %2139 = vmatprep.subr.mxu0 0.0
        %2140 = vmatpush1.msra.mxu0 0.0
        %2141 = vmatprep.subr.mxu0 0.0
        %2142 = vmatpush1.msra.mxu0 0.0
        %2143 = vmatprep.subr.mxu0 0.0
        %2144 = vmatpush1.msra.mxu0 0.0
        %2145 = vmatprep.subr.mxu0 0.0
        %2146 = vmatpush1.msra.mxu0 0.0
        %2147 = vmatprep.subr.mxu0 0.0
        %2148 = vmatpush1.msra.mxu0 0.0
        %2149 = vmatprep.subr.mxu0 0.0
        %2150 = vmatpush1.msra.mxu0 0.0
        %2151 = vmatprep.subr.mxu0 0.0
        %2152 = vmatpush1.msra.mxu0 0.0
        %2153 = vmatprep.subr.mxu0 0.0
        %2154 = vmatpush1.msra.mxu0 0.0
        %2155 = vmatprep.subr.mxu0 0.0
        %2156 = vmatpush1.msra.mxu0 0.0
        %2157 = vmatprep.subr.mxu0 0.0
        %2158 = vmatpush1.msra.mxu0 0.0
        %2159 = vmatprep.subr.mxu0 0.0
        %2160 = vmatpush1.msra.mxu0 0.0
        %2161 = vmatprep.subr.mxu0 0.0
        %2162 = vmatpush1.msra.mxu0 0.0
        %2163 = vmatprep.subr.mxu0 0.0
        %2164 = vmatpush1.msra.mxu0 0.0
        %2165 = vmatprep.mubr.f32.mxu0 0.0
        %2166 = vmatmul.mubr.f32.gmra.mrb[0].mxu0 %v2096
        %v2167 = vpop.f32.mrb[0].mxu0
        %v2168 = vadd.f32 %v2092, %v2167
        %v2169 = vpop.f32.mrb[0].mxu0
        %2170 = vdwg.mxu0
        %v2171 = vld [vmem:[#allocation3 + $0x2] sm:$0x1]
        %s2172 = scalar_lea.vmem %s9, 64
        %v2173 = vld [vmem:[%s2172] sm:$0xff]
        %v2174 = vld [vmem:[%s2172 + $0x8] sm:$0xff]
        %v2175 = vld [vmem:[%s2172 + $0x10] sm:$0xff]
        %v2176 = vld [vmem:[%s2172 + $0x18] sm:$0x3f]
        %v2178 = vsel %vm2017, %v2171, 0
        %v2181 = vsel %vm2021, %v2176, 0
        %2183 = vmatprep.subr.mxu0 0.0
        %2184 = vmatpush1.msra.mxu0 %v2173
        %2185 = vmatprep.subr.mxu0 0.0
        %2186 = vmatpush1.msra.mxu0 %v2174
        %2187 = vmatprep.subr.mxu0 0.0
        %2188 = vmatpush1.msra.mxu0 %v2175
        %2189 = vmatprep.subr.mxu0 0.0
        %2190 = vmatpush1.msra.mxu0 %v2181
        %2191 = vmatprep.subr.mxu0 0.0
        %2192 = vmatpush1.msra.mxu0 0.0
        %2193 = vmatprep.subr.mxu0 0.0
        %2194 = vmatpush1.msra.mxu0 0.0
        %2195 = vmatprep.subr.mxu0 0.0
        %2196 = vmatpush1.msra.mxu0 0.0
        %2197 = vmatprep.subr.mxu0 0.0
        %2198 = vmatpush1.msra.mxu0 0.0
        %2199 = vmatprep.subr.mxu0 0.0
        %2200 = vmatpush1.msra.mxu0 0.0
        %2201 = vmatprep.subr.mxu0 0.0
        %2202 = vmatpush1.msra.mxu0 0.0
        %2203 = vmatprep.subr.mxu0 0.0
        %2204 = vmatpush1.msra.mxu0 0.0
        %2205 = vmatprep.subr.mxu0 0.0
        %2206 = vmatpush1.msra.mxu0 0.0
        %2207 = vmatprep.subr.mxu0 0.0
        %2208 = vmatpush1.msra.mxu0 0.0
        %2209 = vmatprep.subr.mxu0 0.0
        %2210 = vmatpush1.msra.mxu0 0.0
        %2211 = vmatprep.subr.mxu0 0.0
        %2212 = vmatpush1.msra.mxu0 0.0
        %2213 = vmatprep.subr.mxu0 0.0
        %2214 = vmatpush1.msra.mxu0 0.0
        %2215 = vmatprep.subr.mxu0 0.0
        %2216 = vmatpush1.msra.mxu0 0.0
        %2217 = vmatprep.subr.mxu0 0.0
        %2218 = vmatpush1.msra.mxu0 0.0
        %2219 = vmatprep.subr.mxu0 0.0
        %2220 = vmatpush1.msra.mxu0 0.0
        %2221 = vmatprep.subr.mxu0 0.0
        %2222 = vmatpush1.msra.mxu0 0.0
        %2223 = vmatprep.subr.mxu0 0.0
        %2224 = vmatpush1.msra.mxu0 0.0
        %2225 = vmatprep.subr.mxu0 0.0
        %2226 = vmatpush1.msra.mxu0 0.0
        %2227 = vmatprep.subr.mxu0 0.0
        %2228 = vmatpush1.msra.mxu0 0.0
        %2229 = vmatprep.subr.mxu0 0.0
        %2230 = vmatpush1.msra.mxu0 0.0
        %2231 = vmatprep.subr.mxu0 0.0
        %2232 = vmatpush1.msra.mxu0 0.0
        %2233 = vmatprep.subr.mxu0 0.0
        %2234 = vmatpush1.msra.mxu0 0.0
        %2235 = vmatprep.subr.mxu0 0.0
        %2236 = vmatpush1.msra.mxu0 0.0
        %2237 = vmatprep.subr.mxu0 0.0
        %2238 = vmatpush1.msra.mxu0 0.0
        %2239 = vmatprep.subr.mxu0 0.0
        %2240 = vmatpush1.msra.mxu0 0.0
        %2241 = vmatprep.subr.mxu0 0.0
        %2242 = vmatpush1.msra.mxu0 0.0
        %2243 = vmatprep.subr.mxu0 0.0
        %2244 = vmatpush1.msra.mxu0 0.0
        %2245 = vmatprep.subr.mxu0 0.0
        %2246 = vmatpush1.msra.mxu0 0.0
        %2247 = vmatprep.mubr.f32.mxu0 0.0
        %2248 = vmatmul.mubr.f32.gmra.mrb[0].mxu0 %v2178
        %v2249 = vpop.f32.mrb[0].mxu0
        %v2250 = vadd.f32 0.0, %v2249
        %v2251 = vpop.f32.mrb[0].mxu0
        %2252 = vdwg.mxu0
        %v2253 = vadd.f32 %v2168, %v2250
        %v2254 = vld [vmem:[#allocation3 + $0x3] sm:$0x1]
        %s2255 = scalar_lea.vmem %s9, 96
        %v2256 = vld [vmem:[%s2255] sm:$0xff]
        %v2257 = vld [vmem:[%s2255 + $0x8] sm:$0xff]
        %v2258 = vld [vmem:[%s2255 + $0x10] sm:$0xff]
        %v2259 = vld [vmem:[%s2255 + $0x18] sm:$0x3f]
        %v2261 = vsel %vm2017, %v2254, 0
        %v2264 = vsel %vm2021, %v2259, 0
        %2266 = vmatprep.subr.mxu0 0.0
        %2267 = vmatpush1.msra.mxu0 %v2256
        %2268 = vmatprep.subr.mxu0 0.0
        %2269 = vmatpush1.msra.mxu0 %v2257
        %2270 = vmatprep.subr.mxu0 0.0
        %2271 = vmatpush1.msra.mxu0 %v2258
        %2272 = vmatprep.subr.mxu0 0.0
        %2273 = vmatpush1.msra.mxu0 %v2264
        %2274 = vmatprep.subr.mxu0 0.0
        %2275 = vmatpush1.msra.mxu0 0.0
        %2276 = vmatprep.subr.mxu0 0.0
        %2277 = vmatpush1.msra.mxu0 0.0
        %2278 = vmatprep.subr.mxu0 0.0
        %2279 = vmatpush1.msra.mxu0 0.0
        %2280 = vmatprep.subr.mxu0 0.0
        %2281 = vmatpush1.msra.mxu0 0.0
        %2282 = vmatprep.subr.mxu0 0.0
        %2283 = vmatpush1.msra.mxu0 0.0
        %2284 = vmatprep.subr.mxu0 0.0
        %2285 = vmatpush1.msra.mxu0 0.0
        %2286 = vmatprep.subr.mxu0 0.0
        %2287 = vmatpush1.msra.mxu0 0.0
        %2288 = vmatprep.subr.mxu0 0.0
        %2289 = vmatpush1.msra.mxu0 0.0
        %2290 = vmatprep.subr.mxu0 0.0
        %2291 = vmatpush1.msra.mxu0 0.0
        %2292 = vmatprep.subr.mxu0 0.0
        %2293 = vmatpush1.msra.mxu0 0.0
        %2294 = vmatprep.subr.mxu0 0.0
        %2295 = vmatpush1.msra.mxu0 0.0
        %2296 = vmatprep.subr.mxu0 0.0
        %2297 = vmatpush1.msra.mxu0 0.0
        %2298 = vmatprep.subr.mxu0 0.0
        %2299 = vmatpush1.msra.mxu0 0.0
        %2300 = vmatprep.subr.mxu0 0.0
        %2301 = vmatpush1.msra.mxu0 0.0
        %2302 = vmatprep.subr.mxu0 0.0
        %2303 = vmatpush1.msra.mxu0 0.0
        %2304 = vmatprep.subr.mxu0 0.0
        %2305 = vmatpush1.msra.mxu0 0.0
        %2306 = vmatprep.subr.mxu0 0.0
        %2307 = vmatpush1.msra.mxu0 0.0
        %2308 = vmatprep.subr.mxu0 0.0
        %2309 = vmatpush1.msra.mxu0 0.0
        %2310 = vmatprep.subr.mxu0 0.0
        %2311 = vmatpush1.msra.mxu0 0.0
        %2312 = vmatprep.subr.mxu0 0.0
        %2313 = vmatpush1.msra.mxu0 0.0
        %2314 = vmatprep.subr.mxu0 0.0
        %2315 = vmatpush1.msra.mxu0 0.0
        %2316 = vmatprep.subr.mxu0 0.0
        %2317 = vmatpush1.msra.mxu0 0.0
        %2318 = vmatprep.subr.mxu0 0.0
        %2319 = vmatpush1.msra.mxu0 0.0
        %2320 = vmatprep.subr.mxu0 0.0
        %2321 = vmatpush1.msra.mxu0 0.0
        %2322 = vmatprep.subr.mxu0 0.0
        %2323 = vmatpush1.msra.mxu0 0.0
        %2324 = vmatprep.subr.mxu0 0.0
        %2325 = vmatpush1.msra.mxu0 0.0
        %2326 = vmatprep.subr.mxu0 0.0
        %2327 = vmatpush1.msra.mxu0 0.0
        %2328 = vmatprep.subr.mxu0 0.0
        %2329 = vmatpush1.msra.mxu0 0.0
        %2330 = vmatprep.mubr.f32.mxu0 0.0
        %2331 = vmatmul.mubr.f32.gmra.mrb[0].mxu0 %v2261
        %v2332 = vpop.f32.mrb[0].mxu0
        %v2333 = vadd.f32 0.0, %v2332
        %v2334 = vpop.f32.mrb[0].mxu0
        %2335 = vdwg.mxu0
        %v2336 = vadd.f32 %v2253, %v2333
        %v2337 = vld [vmem:[#allocation3 + $0x4] sm:$0x1]
        %s2338 = scalar_lea.vmem %s9, 128
        %v2339 = vld [vmem:[%s2338] sm:$0xff]
        %v2340 = vld [vmem:[%s2338 + $0x8] sm:$0xff]
        %v2341 = vld [vmem:[%s2338 + $0x10] sm:$0xff]
        %v2342 = vld [vmem:[%s2338 + $0x18] sm:$0x3f]
        %v2344 = vsel %vm2017, %v2337, 0
        %v2347 = vsel %vm2021, %v2342, 0
        %2349 = vmatprep.subr.mxu0 0.0
        %2350 = vmatpush1.msra.mxu0 %v2339
        %2351 = vmatprep.subr.mxu0 0.0
        %2352 = vmatpush1.msra.mxu0 %v2340
        %2353 = vmatprep.subr.mxu0 0.0
        %2354 = vmatpush1.msra.mxu0 %v2341
        %2355 = vmatprep.subr.mxu0 0.0
        %2356 = vmatpush1.msra.mxu0 %v2347
        %2357 = vmatprep.subr.mxu0 0.0
        %2358 = vmatpush1.msra.mxu0 0.0
        %2359 = vmatprep.subr.mxu0 0.0
        %2360 = vmatpush1.msra.mxu0 0.0
        %2361 = vmatprep.subr.mxu0 0.0
        %2362 = vmatpush1.msra.mxu0 0.0
        %2363 = vmatprep.subr.mxu0 0.0
        %2364 = vmatpush1.msra.mxu0 0.0
        %2365 = vmatprep.subr.mxu0 0.0
        %2366 = vmatpush1.msra.mxu0 0.0
        %2367 = vmatprep.subr.mxu0 0.0
        %2368 = vmatpush1.msra.mxu0 0.0
        %2369 = vmatprep.subr.mxu0 0.0
        %2370 = vmatpush1.msra.mxu0 0.0
        %2371 = vmatprep.subr.mxu0 0.0
        %2372 = vmatpush1.msra.mxu0 0.0
        %2373 = vmatprep.subr.mxu0 0.0
        %2374 = vmatpush1.msra.mxu0 0.0
        %2375 = vmatprep.subr.mxu0 0.0
        %2376 = vmatpush1.msra.mxu0 0.0
        %2377 = vmatprep.subr.mxu0 0.0
        %2378 = vmatpush1.msra.mxu0 0.0
        %2379 = vmatprep.subr.mxu0 0.0
        %2380 = vmatpush1.msra.mxu0 0.0
        %2381 = vmatprep.subr.mxu0 0.0
        %2382 = vmatpush1.msra.mxu0 0.0
        %2383 = vmatprep.subr.mxu0 0.0
        %2384 = vmatpush1.msra.mxu0 0.0
        %2385 = vmatprep.subr.mxu0 0.0
        %2386 = vmatpush1.msra.mxu0 0.0
        %2387 = vmatprep.subr.mxu0 0.0
        %2388 = vmatpush1.msra.mxu0 0.0
        %2389 = vmatprep.subr.mxu0 0.0
        %2390 = vmatpush1.msra.mxu0 0.0
        %2391 = vmatprep.subr.mxu0 0.0
        %2392 = vmatpush1.msra.mxu0 0.0
        %2393 = vmatprep.subr.mxu0 0.0
        %2394 = vmatpush1.msra.mxu0 0.0
        %2395 = vmatprep.subr.mxu0 0.0
        %2396 = vmatpush1.msra.mxu0 0.0
        %2397 = vmatprep.subr.mxu0 0.0
        %2398 = vmatpush1.msra.mxu0 0.0
        %2399 = vmatprep.subr.mxu0 0.0
        %2400 = vmatpush1.msra.mxu0 0.0
        %2401 = vmatprep.subr.mxu0 0.0
        %2402 = vmatpush1.msra.mxu0 0.0
        %2403 = vmatprep.subr.mxu0 0.0
        %2404 = vmatpush1.msra.mxu0 0.0
        %2405 = vmatprep.subr.mxu0 0.0
        %2406 = vmatpush1.msra.mxu0 0.0
        %2407 = vmatprep.subr.mxu0 0.0
        %2408 = vmatpush1.msra.mxu0 0.0
        %2409 = vmatprep.subr.mxu0 0.0
        %2410 = vmatpush1.msra.mxu0 0.0
        %2411 = vmatprep.subr.mxu0 0.0
        %2412 = vmatpush1.msra.mxu0 0.0
        %2413 = vmatprep.mubr.f32.mxu0 0.0
        %2414 = vmatmul.mubr.f32.gmra.mrb[0].mxu0 %v2344
        %v2415 = vpop.f32.mrb[0].mxu0
        %v2416 = vadd.f32 0.0, %v2415
        %v2417 = vpop.f32.mrb[0].mxu0
        %2418 = vdwg.mxu0
        %v2419 = vadd.f32 %v2336, %v2416
        %v2420 = vld [vmem:[%s10] sm:$0x1]
        %v2421 = vadd.f32 %v2419, %v2420
        %v2422 = vmax.f32 %v2421, 0.0
        %v2423 = vld [vmem:[%s11] sm:$0xff]
        %v2424 = vld [vmem:[%s11 + $0x8] sm:$0xff]
        %v2425 = vld [vmem:[%s11 + $0x10] sm:$0xff]
        %v2426 = vld [vmem:[%s11 + $0x18] sm:$0xff]
        %v2427 = vld [vmem:[%s11 + $0x20] sm:$0xff]
        %v2428 = vld [vmem:[%s11 + $0x28] sm:$0xff]
        %v2429 = vld [vmem:[%s11 + $0x30] sm:$0xff]
        %v2430 = vld [vmem:[%s11 + $0x38] sm:$0xff]
        %v2431 = vld [vmem:[%s11 + $0x40] sm:$0xff]
        %v2432 = vld [vmem:[%s11 + $0x48] sm:$0xff]
        %v2433 = vld [vmem:[%s11 + $0x50] sm:$0xff]
        %v2434 = vld [vmem:[%s11 + $0x58] sm:$0xff]
        %v2435 = vld [vmem:[%s11 + $0x60] sm:$0xff]
        %v2436 = vld [vmem:[%s11 + $0x68] sm:$0xff]
        %v2437 = vld [vmem:[%s11 + $0x70] sm:$0xff]
        %v2438 = vld [vmem:[%s12] sm:$0x1]
        %vm2439 = vcmask 982016
        %v2441 = vsel %vm2439, %v2422, 0
        %2443 = vmatprep.subr.mxu0 0.0
        %2444 = vmatpush1.msra.mxu0 %v2423
        %2445 = vmatprep.subr.mxu0 0.0
        %2446 = vmatpush1.msra.mxu0 %v2424
        %2447 = vmatprep.subr.mxu0 0.0
        %2448 = vmatpush1.msra.mxu0 %v2425
        %2449 = vmatprep.subr.mxu0 0.0
        %2450 = vmatpush1.msra.mxu0 %v2426
        %2451 = vmatprep.subr.mxu0 0.0
        %2452 = vmatpush1.msra.mxu0 %v2427
        %2453 = vmatprep.subr.mxu0 0.0
        %2454 = vmatpush1.msra.mxu0 %v2428
        %2455 = vmatprep.subr.mxu0 0.0
        %2456 = vmatpush1.msra.mxu0 %v2429
        %2457 = vmatprep.subr.mxu0 0.0
        %2458 = vmatpush1.msra.mxu0 %v2430
        %2459 = vmatprep.subr.mxu0 0.0
        %2460 = vmatpush1.msra.mxu0 %v2431
        %2461 = vmatprep.subr.mxu0 0.0
        %2462 = vmatpush1.msra.mxu0 %v2432
        %2463 = vmatprep.subr.mxu0 0.0
        %2464 = vmatpush1.msra.mxu0 %v2433
        %2465 = vmatprep.subr.mxu0 0.0
        %2466 = vmatpush1.msra.mxu0 %v2434
        %2467 = vmatprep.subr.mxu0 0.0
        %2468 = vmatpush1.msra.mxu0 %v2435
        %2469 = vmatprep.subr.mxu0 0.0
        %2470 = vmatpush1.msra.mxu0 %v2436
        %2471 = vmatprep.subr.mxu0 0.0
        %2472 = vmatpush1.msra.mxu0 %v2437
        %2473 = vmatprep.subr.mxu0 0.0
        %2474 = vmatpush1.msra.mxu0 0.0
        %2475 = vmatprep.subr.mxu0 0.0
        %2476 = vmatpush1.msra.mxu0 0.0
        %2477 = vmatprep.subr.mxu0 0.0
        %2478 = vmatpush1.msra.mxu0 0.0
        %2479 = vmatprep.subr.mxu0 0.0
        %2480 = vmatpush1.msra.mxu0 0.0
        %2481 = vmatprep.subr.mxu0 0.0
        %2482 = vmatpush1.msra.mxu0 0.0
        %2483 = vmatprep.subr.mxu0 0.0
        %2484 = vmatpush1.msra.mxu0 0.0
        %2485 = vmatprep.subr.mxu0 0.0
        %2486 = vmatpush1.msra.mxu0 0.0
        %2487 = vmatprep.subr.mxu0 0.0
        %2488 = vmatpush1.msra.mxu0 0.0
        %2489 = vmatprep.subr.mxu0 0.0
        %2490 = vmatpush1.msra.mxu0 0.0
        %2491 = vmatprep.subr.mxu0 0.0
        %2492 = vmatpush1.msra.mxu0 0.0
        %2493 = vmatprep.subr.mxu0 0.0
        %2494 = vmatpush1.msra.mxu0 0.0
        %2495 = vmatprep.subr.mxu0 0.0
        %2496 = vmatpush1.msra.mxu0 0.0
        %2497 = vmatprep.subr.mxu0 0.0
        %2498 = vmatpush1.msra.mxu0 0.0
        %2499 = vmatprep.subr.mxu0 0.0
        %2500 = vmatpush1.msra.mxu0 0.0
        %2501 = vmatprep.subr.mxu0 0.0
        %2502 = vmatpush1.msra.mxu0 0.0
        %2503 = vmatprep.subr.mxu0 0.0
        %2504 = vmatpush1.msra.mxu0 0.0
        %2505 = vmatprep.subr.mxu0 0.0
        %2506 = vmatpush1.msra.mxu0 0.0
        %2507 = vmatprep.mubr.f32.mxu0 0.0
        %2508 = vmatmul.mubr.f32.gmra.mrb[0].mxu0 %v2441
        %v2509 = vpop.f32.mrb[0].mxu0
        %v2510 = vadd.f32 %v2438, %v2509
        %v2511 = vpop.f32.mrb[0].mxu0
        %2512 = vdwg.mxu0
        %v2513 = vmax.f32 %v2510, 0.0
        %v2514 = vld [vmem:[%s13] sm:$0xff]
        %v2515 = vld [vmem:[%s13 + $0x8] sm:$0xff]
        %v2516 = vld [vmem:[%s13 + $0x10] sm:$0xff]
        %v2517 = vld [vmem:[%s13 + $0x18] sm:$0xff]
        %v2518 = vld [vmem:[%s13 + $0x20] sm:$0xff]
        %v2519 = vld [vmem:[%s13 + $0x28] sm:$0xff]
        %v2520 = vld [vmem:[%s13 + $0x30] sm:$0xff]
        %v2521 = vld [vmem:[%s13 + $0x38] sm:$0xff]
        %v2522 = vld [vmem:[%s13 + $0x40] sm:$0xff]
        %v2523 = vld [vmem:[%s13 + $0x48] sm:$0xff]
        %v2524 = vld [vmem:[%s13 + $0x50] sm:$0xf]
        %v2525 = vld [vmem:[%s14] sm:$0x1]
        %v2527 = vsel %vm1330, %v2513, 0
        %v2530 = vsel %vm1143, %v2524, 0
        %2532 = vmatprep.subr.mxu0 0.0
        %2533 = vmatpush1.msra.mxu0 %v2514
        %2534 = vmatprep.subr.mxu0 0.0
        %2535 = vmatpush1.msra.mxu0 %v2515
        %2536 = vmatprep.subr.mxu0 0.0
        %2537 = vmatpush1.msra.mxu0 %v2516
        %2538 = vmatprep.subr.mxu0 0.0
        %2539 = vmatpush1.msra.mxu0 %v2517
        %2540 = vmatprep.subr.mxu0 0.0
        %2541 = vmatpush1.msra.mxu0 %v2518
        %2542 = vmatprep.subr.mxu0 0.0
        %2543 = vmatpush1.msra.mxu0 %v2519
        %2544 = vmatprep.subr.mxu0 0.0
        %2545 = vmatpush1.msra.mxu0 %v2520
        %2546 = vmatprep.subr.mxu0 0.0
        %2547 = vmatpush1.msra.mxu0 %v2521
        %2548 = vmatprep.subr.mxu0 0.0
        %2549 = vmatpush1.msra.mxu0 %v2522
        %2550 = vmatprep.subr.mxu0 0.0
        %2551 = vmatpush1.msra.mxu0 %v2523
        %2552 = vmatprep.subr.mxu0 0.0
        %2553 = vmatpush1.msra.mxu0 %v2530
        %2554 = vmatprep.subr.mxu0 0.0
        %2555 = vmatpush1.msra.mxu0 0.0
        %2556 = vmatprep.subr.mxu0 0.0
        %2557 = vmatpush1.msra.mxu0 0.0
        %2558 = vmatprep.subr.mxu0 0.0
        %2559 = vmatpush1.msra.mxu0 0.0
        %2560 = vmatprep.subr.mxu0 0.0
        %2561 = vmatpush1.msra.mxu0 0.0
        %2562 = vmatprep.subr.mxu0 0.0
        %2563 = vmatpush1.msra.mxu0 0.0
        %2564 = vmatprep.subr.mxu0 0.0
        %2565 = vmatpush1.msra.mxu0 0.0
        %2566 = vmatprep.subr.mxu0 0.0
        %2567 = vmatpush1.msra.mxu0 0.0
        %2568 = vmatprep.subr.mxu0 0.0
        %2569 = vmatpush1.msra.mxu0 0.0
        %2570 = vmatprep.subr.mxu0 0.0
        %2571 = vmatpush1.msra.mxu0 0.0
        %2572 = vmatprep.subr.mxu0 0.0
        %2573 = vmatpush1.msra.mxu0 0.0
        %2574 = vmatprep.subr.mxu0 0.0
        %2575 = vmatpush1.msra.mxu0 0.0
        %2576 = vmatprep.subr.mxu0 0.0
        %2577 = vmatpush1.msra.mxu0 0.0
        %2578 = vmatprep.subr.mxu0 0.0
        %2579 = vmatpush1.msra.mxu0 0.0
        %2580 = vmatprep.subr.mxu0 0.0
        %2581 = vmatpush1.msra.mxu0 0.0
        %2582 = vmatprep.subr.mxu0 0.0
        %2583 = vmatpush1.msra.mxu0 0.0
        %2584 = vmatprep.subr.mxu0 0.0
        %2585 = vmatpush1.msra.mxu0 0.0
        %2586 = vmatprep.subr.mxu0 0.0
        %2587 = vmatpush1.msra.mxu0 0.0
        %2588 = vmatprep.subr.mxu0 0.0
        %2589 = vmatpush1.msra.mxu0 0.0
        %2590 = vmatprep.subr.mxu0 0.0
        %2591 = vmatpush1.msra.mxu0 0.0
        %2592 = vmatprep.subr.mxu0 0.0
        %2593 = vmatpush1.msra.mxu0 0.0
        %2594 = vmatprep.subr.mxu0 0.0
        %2595 = vmatpush1.msra.mxu0 0.0
        %2596 = vmatprep.mubr.f32.mxu0 0.0
        %2597 = vmatmul.mubr.f32.gmra.mrb[0].mxu0 %v2527
        %v2598 = vpop.f32.mrb[0].mxu0
        %v2599 = vadd.f32 %v2525, %v2598
        %v2600 = vpop.f32.mrb[0].mxu0
        %2601 = vdwg.mxu0
        %vm2602 = vcmask 811008
        %2603 = vst.msk [vmem:[%s511] sm:$0x1] %vm2602, %v2599
        %s2604 = sand.u32 %s360, 1
        %s2605 = scalar_lea.sflag [#allocation6], %s2604
        %s2606 = sand.u32 %s360, 1
        %s2607 = scalar_lea.vmem [#allocation7], %s2606
        // Predicated region
        $region85: #{lenet_forward.1} parent=79 // pred_check
          %p2608 = pneg %p370
        $region86: #{lenet_forward.1} parent=79 // pred_check_branch
          %2610 = sbr.rel (%p2608) target = $region88
        $region87: #{lenet_forward.1} parent=79 // pred_region
          %s2612 = ssub.s32 16, 16
          %2613 = vsyncadd %s2605, %s2612
          %s2614 = smul.addr %s32, 16
          %s2615 = scalar_lea.hbm %s15, %s2614
          %s2617 = sshll.u32 %s2607, 4
          %s2618 = int_to_ptr.vmem [resolvable:$true] %s2617
          %2620 = dma.vmem_to_hbm [thread:$0]  %s2618, 16, %s2615, %s2605
        $region88: #{lenet_forward.1} parent=79 // pred_fallthru
          _
      $region80: #{lenet_forward.1} parent=5 // pred_fallthru
        _
      %p2621 = scmp.le.s32.totalorder 2, %s27
      // Predicated region
      $region89: #{lenet_forward.1} parent=5 // pred_check
        %p2622 = pneg %p2621
      $region90: #{lenet_forward.1} parent=5 // pred_check_branch
        %2624 = sbr.rel (%p2622) target = $region92
      $region91: #{lenet_forward.1} parent=5 // pred_region
        %s2625 = ssub.s32 %s27, 2
        // Predicated region
        $region93: #{lenet_forward.1} parent=91 // pred_check
          %p2626 = pneg %p376
        $region94: #{lenet_forward.1} parent=91 // pred_check_branch
          %2628 = sbr.rel (%p2626) target = $region96
        $region95: #{lenet_forward.1} parent=91 // pred_region
          %s2629 = sand.u32 %s361, 1
          %s2630 = scalar_lea.sflag [#allocation6], %s2629
          %s2631 = sand.u32 %s361, 1
          %s2632 = scalar_lea.vmem [#allocation7], %s2631
          %2633 = dma.done %s2630, 16
        $region96: #{lenet_forward.1} parent=91 // pred_fallthru
          _
      $region92: #{lenet_forward.1} parent=5 // pred_fallthru
        _
    $region6: #{lenet_forward.1} parent=1 // loop_footer
      %s31 = sadd.s32 1, %s27
    $region7: #{lenet_forward.1} parent=1 // loop_footer_branch
      %26 = sbr.rel target = $region3
    $region8: #{lenet_forward.1} parent=1 // loop_exit
      _
    %2634 = vsyncpa [#allocation5], 1
    %s2635 = scalar_lea.sflag [#allocation5], 1
    %2636 = vsyncpa %s2635, 1
    %2637 = vsyncpa [#allocation6], 1
    %s2638 = scalar_lea.sflag [#allocation6], 1
    %2639 = vsyncpa %s2638, 1

</llo_original>
